<compile_context>
chip_gen: v7x
topology: tpu7x:2x2x1
jax: 0.10.0
libtpu: 0.0.40
codegen_flags: <defaults>
</compile_context>

<pallas_src>
import jax
import jax.numpy as jnp
from jax import lax
from jax.experimental import pallas as pl
from jax.experimental.pallas import tpu as pltpu


def _round_up(x, m):
    return (x + m - 1) // m * m


# ----------------------------- Pallas kernels ------------------------------

def _conv_relu_pool_kernel(p_ref, w_ref, b_ref, o_ref):
    """Fused conv (im2col matmul) + bias + ReLU + 2x2 max-pool, transposed.

    p_ref: (4, K, rows)   pool-position-major patches; rows on lanes. bf16.
    w_ref: (Cout, K)      bf16.
    b_ref: (Cout, 1)      f32.
    o_ref: (Cout, rows)   pooled output (lane-dense rows).
    """
    w = w_ref[...]

    def branch(p):
        # (Cout, K) @ (K, rows): rows on lanes -> few result vregs per branch.
        return jnp.dot(w, p_ref[p], preferred_element_type=jnp.float32,
                       precision=lax.Precision.DEFAULT)

    # Running max over pool positions: at most two branch results live.
    acc = branch(0)
    for p in range(1, 4):
        acc = jnp.maximum(acc, branch(p))
    # relu(max_p(z_p) + b) == max_p(relu(z_p + b)): bias/ReLU applied once.
    o_ref[...] = jnp.maximum(acc + b_ref[...], 0.0).astype(o_ref.dtype)


def _mlp_kernel(x_ref, w1_ref, b1_ref, w2_ref, b2_ref, w3_ref, b3_ref, o_ref):
    """Fused fc1+ReLU -> fc2+ReLU -> fc3; bf16 matmuls, f32 accumulation."""
    def dot(a, b):
        return jnp.dot(a, b, preferred_element_type=jnp.float32,
                       precision=lax.Precision.DEFAULT)

    h = jnp.maximum(dot(x_ref[...], w1_ref[...]) + b1_ref[...], 0.0)
    h = jnp.maximum(dot(h.astype(jnp.bfloat16), w2_ref[...]) + b2_ref[...], 0.0)
    o_ref[...] = (dot(h.astype(jnp.bfloat16), w3_ref[...])
                  + b3_ref[...]).astype(o_ref.dtype)


# ------------------------------ Pallas wrappers ----------------------------

def conv_relu_pool(patches, w_mat, bias, *, out_dtype, rows_blk):
    """patches: (4, K, R) -> pooled output (Cout, R), R = N * pooled pixels."""
    _, kdim, r = patches.shape
    cout = w_mat.shape[0]

    # Smallest 128-multiple row block covering R in ceil(R / rows_blk) steps:
    # lane-dense stores, minimal pad rows, >=2 steps for large batches.
    steps = -(-r // rows_blk)
    rb = _round_up(-(-r // steps), 128)
    r_pad = rb * steps
    if r_pad != r:
        patches = jnp.pad(patches, ((0, 0), (0, 0), (0, r_pad - r)))

    out = pl.pallas_call(
        _conv_relu_pool_kernel,
        out_shape=jax.ShapeDtypeStruct((cout, r_pad), out_dtype),
        grid=(steps,),
        in_specs=[
            pl.BlockSpec((4, kdim, rb), lambda i: (0, 0, i)),
            pl.BlockSpec((cout, kdim), lambda i: (0, 0)),
            pl.BlockSpec((cout, 1), lambda i: (0, 0)),
        ],
        out_specs=pl.BlockSpec((cout, rb), lambda i: (0, i)),
        compiler_params=pltpu.CompilerParams(
            dimension_semantics=("parallel",),
            vmem_limit_bytes=32 * 1024 * 1024),
    )(patches, w_mat, bias.reshape(cout, 1).astype(jnp.float32))
    return out[:, :r]


def mlp(x, w1, b1, w2, b2, w3, b3, *, row_blk=256):
    """x: (N, 400) bf16 -> (N, 10) f32 via one fused 3-layer kernel."""
    n, din = x.shape
    d1, d2, dout = w1.shape[1], w2.shape[1], w3.shape[1]

    # Cap the row block near n/2 (multiple of 8) so batches >= 32 give the
    # grid >= 2 steps (both v7x TensorCores get work); weights stay resident.
    rb = min(row_blk, max(8, _round_up(n, 16) // 2))
    n_pad = _round_up(n, rb)
    if n_pad != n:
        x = jnp.pad(x, ((0, n_pad - n), (0, 0)))

    const = lambda shape: pl.BlockSpec(shape, lambda i: (0, 0))
    out = pl.pallas_call(
        _mlp_kernel,
        out_shape=jax.ShapeDtypeStruct((n_pad, dout), jnp.float32),
        grid=(n_pad // rb,),
        in_specs=[
            pl.BlockSpec((rb, din), lambda i: (i, 0)),
            const((din, d1)), const((1, d1)),
            const((d1, d2)), const((1, d2)),
            const((d2, dout)), const((1, dout)),
        ],
        out_specs=pl.BlockSpec((rb, dout), lambda i: (i, 0)),
        compiler_params=pltpu.CompilerParams(
            dimension_semantics=("parallel",),
            vmem_limit_bytes=32 * 1024 * 1024),
    )(x, w1, b1.reshape(1, d1).astype(jnp.float32),
      w2, b2.reshape(1, d2).astype(jnp.float32),
      w3, b3.reshape(1, dout).astype(jnp.float32))
    return out[:n]


# ------------------------------ JAX glue -----------------------------------

def _im2col_pool_groups_T(x_nhwc, k):
    """5x5 valid patches grouped by 2x2 max-pool position, transposed layout.

    Returns (4, k*k*C, N*hp*wp): axis 0 = pool offset (dh*2+dw), axis 1 = K
    flattened in (kh, kw, cin) order (matches w.transpose(0,2,3,1).reshape),
    axis 2 = rows (image-major, pooled pixel row-major).
    """
    n, h, w, c = x_nhwc.shape
    ho, wo = h - k + 1, w - k + 1
    hp, wp = ho // 2, wo // 2
    cols = [x_nhwc[:, kh:kh + ho, kw:kw + wo, :]
            for kh in range(k) for kw in range(k)]
    p = jnp.stack(cols, axis=0)                    # (kk, N, ho, wo, C)
    p = p.reshape(k * k, n, hp, 2, wp, 2, c)       # split 2x2 pool windows
    p = jnp.transpose(p, (3, 5, 0, 6, 1, 2, 4))    # (dh, dw, kk, C, N, hp, wp)
    return p.reshape(4, k * k * c, n * hp * wp)


def lenet_forward_pallas(x_nchw, p):
    n = x_nchw.shape[0]
    bf16 = jnp.bfloat16
    x = jnp.transpose(x_nchw, (0, 2, 3, 1)).astype(bf16)          # NHWC bf16

    # conv1 (3->6, 5x5) + ReLU + maxpool : 32x32 -> 28x28 -> 14x14
    patches1 = _im2col_pool_groups_T(x, 5)                        # (4, 75, N*196)
    w1c = jnp.transpose(p["conv1_w"], (0, 2, 3, 1)).reshape(6, 75).astype(bf16)
    y1 = conv_relu_pool(patches1, w1c, p["conv1_b"],
                        out_dtype=bf16, rows_blk=6272)            # (6, N*196)
    y1 = jnp.transpose(y1.reshape(6, n, 14, 14), (1, 2, 3, 0))    # (N,14,14,6)

    # conv2 (6->16, 5x5) + ReLU + maxpool : 14x14 -> 10x10 -> 5x5
    patches2 = _im2col_pool_groups_T(y1, 5)                       # (4, 150, N*25)
    w2c = jnp.transpose(p["conv2_w"], (0, 2, 3, 1)).reshape(16, 150).astype(bf16)
    y2 = conv_relu_pool(patches2, w2c, p["conv2_b"],
                        out_dtype=bf16, rows_blk=3200)            # (16, N*25)

    # Flatten to PyTorch's NCHW .view() order: feat[n, c*25 + pix].
    feat = jnp.transpose(y2.reshape(16, n, 25), (1, 0, 2)).reshape(n, 400)

    return mlp(feat,
               p["fc1_w"].T.astype(bf16), p["fc1_b"],
               p["fc2_w"].T.astype(bf16), p["fc2_b"],
               p["fc3_w"].T.astype(bf16), p["fc3_b"])             # (N, 10) f32


# ------------------------- pure-JAX reference (check) -----------------------

def lenet_forward_ref(x, p):
    hi = lax.Precision.HIGHEST   # full-precision reference, set locally only

    def conv(x, w, b):
        y = lax.conv_general_dilated(x, w, (1, 1), "VALID",
                                     dimension_numbers=("NCHW", "OIHW", "NCHW"),
                                     precision=hi)
        return y + b[None, :, None, None]

    def pool(x):
        n, c, h, w = x.shape
        return x.reshape(n, c, h // 2, 2, w // 2, 2).max(axis=(3, 5))

    y = pool(jnp.maximum(conv(x, p["conv1_w"], p["conv1_b"]), 0.0))
    y = pool(jnp.maximum(conv(y, p["conv2_w"], p["conv2_b"]), 0.0))
    y = y.reshape(x.shape[0], -1)
    y = jnp.maximum(jnp.dot(y, p["fc1_w"].T, precision=hi) + p["fc1_b"], 0.0)
    y = jnp.maximum(jnp.dot(y, p["fc2_w"].T, precision=hi) + p["fc2_b"], 0.0)
    return jnp.dot(y, p["fc3_w"].T, precision=hi) + p["fc3_b"]


# ------------------------------ params -------------------------------------

def init_params(key):
    def uni(k, shape, fan_in):
        bound = 1.0 / (fan_in ** 0.5)
        return jax.random.uniform(k, shape, jnp.float32, -bound, bound)

    ks = jax.random.split(key, 10)
    return dict(
        conv1_w=uni(ks[0], (6, 3, 5, 5), 3 * 25),
        conv1_b=uni(ks[1], (6,), 3 * 25),
        conv2_w=uni(ks[2], (16, 6, 5, 5), 6 * 25),
        conv2_b=uni(ks[3], (16,), 6 * 25),
        fc1_w=uni(ks[4], (120, 16 * 5 * 5), 400),
        fc1_b=uni(ks[5], (120,), 400),
        fc2_w=uni(ks[6], (84, 120), 120),
        fc2_b=uni(ks[7], (84,), 120),
        fc3_w=uni(ks[8], (10, 84), 84),
        fc3_b=uni(ks[9], (10,), 84),
    )


if __name__ == "__main__":
    key = jax.random.PRNGKey(0)
    kp, kx = jax.random.split(key)
    params = init_params(kp)

    # CIFAR-10 sized input (32x32 required by fc1's 16*5*5 input dim); batch=2.
    x = jax.random.normal(kx, (2, 3, 32, 32), jnp.float32)        # NCHW like PyTorch

    out = jax.jit(lenet_forward_pallas)(x, params)
    out = jax.block_until_ready(out)

    ref = lenet_forward_ref(x, params)
    assert out.shape == (2, 10), out.shape
    # Tolerance accounts for bf16 conv + MLP inputs/weights (f32 accumulation
    # everywhere); measured error is around 1e-2 at these scales.
    err = float(jnp.max(jnp.abs(out - ref)))
    if not (err < 3e-2):
        raise AssertionError(f"Pallas output mismatch vs reference: max abs err {err}")
    print("KERNEL_OK")
</pallas_src>

<mosaic_0001>
module attributes {stable_mosaic.version = 11 : i64} {
  func.func @_conv_relu_pool_kernel(%arg0: i32, %arg1: memref<4x75x512xbf16, #tpu.memory_space<vmem>>, %arg2: memref<6x75xbf16, #tpu.memory_space<vmem>>, %arg3: memref<6x1xf32, #tpu.memory_space<vmem>>, %arg4: memref<6x512xbf16, #tpu.memory_space<vmem>>) attributes {dimension_semantics = [#tpu.dimension_semantics<parallel>], iteration_bounds = array<i64: 1>, scalar_prefetch = 0 : i64, scratch_operands = 0 : i64, tpu.core_type = #tpu.core_type<tc>, window_params = [{transform_indices = @transform_0, window_bounds = array<i64: 4, 75, 512>}, {pipeline_mode = #tpu.pipeline_mode<synchronous>, transform_indices = @transform_1, window_bounds = array<i64: 6, 75>}, {pipeline_mode = #tpu.pipeline_mode<synchronous>, transform_indices = @transform_2, window_bounds = array<i64: 6, 1>}, {transform_indices = @transform_3, window_bounds = array<i64: 6, 512>}]} {
    %c0 = arith.constant 0 : index
    %c0_0 = arith.constant 0 : index
    %0 = vector.load %arg2[%c0, %c0_0] : memref<6x75xbf16, #tpu.memory_space<vmem>>, vector<6x75xbf16>
    %c0_1 = arith.constant 0 : index
    %c0_2 = arith.constant 0 : index
    %c0_3 = arith.constant 0 : index
    %1 = vector.load %arg1[%c0_1, %c0_2, %c0_3] : memref<4x75x512xbf16, #tpu.memory_space<vmem>>, vector<1x75x512xbf16>
    %2 = vector.shape_cast %1 : vector<1x75x512xbf16> to vector<75x512xbf16>
    %cst = arith.constant dense<0.000000e+00> : vector<6x512xf32>
    %3 = tpu.matmul %0, %2, %cst {dimension_numbers = #tpu.dot_dimension_numbers<[1], [0], [0], [1], [0, 0, 1, 1], [], []>} : vector<6x75xbf16>, vector<75x512xbf16>, vector<6x512xf32> -> vector<6x512xf32>
    %c1 = arith.constant 1 : index
    %c0_4 = arith.constant 0 : index
    %c0_5 = arith.constant 0 : index
    %4 = vector.load %arg1[%c1, %c0_4, %c0_5] : memref<4x75x512xbf16, #tpu.memory_space<vmem>>, vector<1x75x512xbf16>
    %5 = vector.shape_cast %4 : vector<1x75x512xbf16> to vector<75x512xbf16>
    %cst_6 = arith.constant dense<0.000000e+00> : vector<6x512xf32>
    %6 = tpu.matmul %0, %5, %cst_6 {dimension_numbers = #tpu.dot_dimension_numbers<[1], [0], [0], [1], [0, 0, 1, 1], [], []>} : vector<6x75xbf16>, vector<75x512xbf16>, vector<6x512xf32> -> vector<6x512xf32>
    %7 = arith.maximumf %3, %6 : vector<6x512xf32>
    %c2 = arith.constant 2 : index
    %c0_7 = arith.constant 0 : index
    %c0_8 = arith.constant 0 : index
    %8 = vector.load %arg1[%c2, %c0_7, %c0_8] : memref<4x75x512xbf16, #tpu.memory_space<vmem>>, vector<1x75x512xbf16>
    %9 = vector.shape_cast %8 : vector<1x75x512xbf16> to vector<75x512xbf16>
    %cst_9 = arith.constant dense<0.000000e+00> : vector<6x512xf32>
    %10 = tpu.matmul %0, %9, %cst_9 {dimension_numbers = #tpu.dot_dimension_numbers<[1], [0], [0], [1], [0, 0, 1, 1], [], []>} : vector<6x75xbf16>, vector<75x512xbf16>, vector<6x512xf32> -> vector<6x512xf32>
    %11 = arith.maximumf %7, %10 : vector<6x512xf32>
    %c3 = arith.constant 3 : index
    %c0_10 = arith.constant 0 : index
    %c0_11 = arith.constant 0 : index
    %12 = vector.load %arg1[%c3, %c0_10, %c0_11] : memref<4x75x512xbf16, #tpu.memory_space<vmem>>, vector<1x75x512xbf16>
    %13 = vector.shape_cast %12 : vector<1x75x512xbf16> to vector<75x512xbf16>
    %cst_12 = arith.constant dense<0.000000e+00> : vector<6x512xf32>
    %14 = tpu.matmul %0, %13, %cst_12 {dimension_numbers = #tpu.dot_dimension_numbers<[1], [0], [0], [1], [0, 0, 1, 1], [], []>} : vector<6x75xbf16>, vector<75x512xbf16>, vector<6x512xf32> -> vector<6x512xf32>
    %15 = arith.maximumf %11, %14 : vector<6x512xf32>
    %c0_13 = arith.constant 0 : index
    %c0_14 = arith.constant 0 : index
    %16 = vector.load %arg3[%c0_13, %c0_14] : memref<6x1xf32, #tpu.memory_space<vmem>>, vector<6x1xf32>
    %17 = vector.broadcast %16 : vector<6x1xf32> to vector<6x512xf32>
    %18 = arith.addf %15, %17 : vector<6x512xf32>
    %cst_15 = arith.constant 0.000000e+00 : f32
    %19 = vector.broadcast %cst_15 : f32 to vector<6x512xf32>
    %20 = arith.maximumf %18, %19 : vector<6x512xf32>
    %21 = arith.truncf %20 : vector<6x512xf32> to vector<6x512xbf16>
    %c0_16 = arith.constant 0 : index
    %c0_17 = arith.constant 0 : index
    %22 = vector.load %arg4[%c0_16, %c0_17] : memref<6x512xbf16, #tpu.memory_space<vmem>>, vector<6x512xbf16>
    tpu.vector_store %arg4[%c0_16, %c0_17], %21 {strides = array<i32>} : memref<6x512xbf16, #tpu.memory_space<vmem>>, vector<6x512xbf16>,
    return
  }
  func.func @transform_0(%arg0: i32) -> (i32, i32, i32) {
    %c0_i32 = arith.constant 0 : i32
    %c0_i32_0 = arith.constant 0 : i32
    %c0_i32_1 = arith.constant 0 : i32
    return %c0_i32, %c0_i32_0, %arg0 : i32, i32, i32
  }
  func.func @transform_1(%arg0: i32) -> (i32, i32) {
    %c0_i32 = arith.constant 0 : i32
    %c0_i32_0 = arith.constant 0 : i32
    %c0_i32_1 = arith.constant 0 : i32
    return %c0_i32, %c0_i32_0 : i32, i32
  }
  func.func @transform_2(%arg0: i32) -> (i32, i32) {
    %c0_i32 = arith.constant 0 : i32
    %c0_i32_0 = arith.constant 0 : i32
    %c0_i32_1 = arith.constant 0 : i32
    return %c0_i32, %c0_i32_0 : i32, i32
  }
  func.func @transform_3(%arg0: i32) -> (i32, i32) {
    %c0_i32 = arith.constant 0 : i32
    %c0_i32_0 = arith.constant 0 : i32
    return %c0_i32, %arg0 : i32, i32
  }
}

module attributes {stable_mosaic.version = 11 : i64} {
  func.func @_conv_relu_pool_kernel(%arg0: i32, %arg1: memref<4x150x128xbf16, #tpu.memory_space<vmem>>, %arg2: memref<16x150xbf16, #tpu.memory_space<vmem>>, %arg3: memref<16x1xf32, #tpu.memory_space<vmem>>, %arg4: memref<16x128xbf16, #tpu.memory_space<vmem>>) attributes {dimension_semantics = [#tpu.dimension_semantics<parallel>], iteration_bounds = array<i64: 1>, scalar_prefetch = 0 : i64, scratch_operands = 0 : i64, tpu.core_type = #tpu.core_type<tc>, window_params = [{transform_indices = @transform_0, window_bounds = array<i64: 4, 150, 128>}, {pipeline_mode = #tpu.pipeline_mode<synchronous>, transform_indices = @transform_1, window_bounds = array<i64: 16, 150>}, {pipeline_mode = #tpu.pipeline_mode<synchronous>, transform_indices = @transform_2, window_bounds = array<i64: 16, 1>}, {transform_indices = @transform_3, window_bounds = array<i64: 16, 128>}]} {
    %c0 = arith.constant 0 : index
    %c0_0 = arith.constant 0 : index
    %0 = vector.load %arg2[%c0, %c0_0] : memref<16x150xbf16, #tpu.memory_space<vmem>>, vector<16x150xbf16>
    %c0_1 = arith.constant 0 : index
    %c0_2 = arith.constant 0 : index
    %c0_3 = arith.constant 0 : index
    %1 = vector.load %arg1[%c0_1, %c0_2, %c0_3] : memref<4x150x128xbf16, #tpu.memory_space<vmem>>, vector<1x150x128xbf16>
    %2 = vector.shape_cast %1 : vector<1x150x128xbf16> to vector<150x128xbf16>
    %cst = arith.constant dense<0.000000e+00> : vector<16x128xf32>
    %3 = tpu.matmul %0, %2, %cst {dimension_numbers = #tpu.dot_dimension_numbers<[1], [0], [0], [1], [0, 0, 1, 1], [], []>} : vector<16x150xbf16>, vector<150x128xbf16>, vector<16x128xf32> -> vector<16x128xf32>
    %c1 = arith.constant 1 : index
    %c0_4 = arith.constant 0 : index
    %c0_5 = arith.constant 0 : index
    %4 = vector.load %arg1[%c1, %c0_4, %c0_5] : memref<4x150x128xbf16, #tpu.memory_space<vmem>>, vector<1x150x128xbf16>
    %5 = vector.shape_cast %4 : vector<1x150x128xbf16> to vector<150x128xbf16>
    %cst_6 = arith.constant dense<0.000000e+00> : vector<16x128xf32>
    %6 = tpu.matmul %0, %5, %cst_6 {dimension_numbers = #tpu.dot_dimension_numbers<[1], [0], [0], [1], [0, 0, 1, 1], [], []>} : vector<16x150xbf16>, vector<150x128xbf16>, vector<16x128xf32> -> vector<16x128xf32>
    %7 = arith.maximumf %3, %6 : vector<16x128xf32>
    %c2 = arith.constant 2 : index
    %c0_7 = arith.constant 0 : index
    %c0_8 = arith.constant 0 : index
    %8 = vector.load %arg1[%c2, %c0_7, %c0_8] : memref<4x150x128xbf16, #tpu.memory_space<vmem>>, vector<1x150x128xbf16>
    %9 = vector.shape_cast %8 : vector<1x150x128xbf16> to vector<150x128xbf16>
    %cst_9 = arith.constant dense<0.000000e+00> : vector<16x128xf32>
    %10 = tpu.matmul %0, %9, %cst_9 {dimension_numbers = #tpu.dot_dimension_numbers<[1], [0], [0], [1], [0, 0, 1, 1], [], []>} : vector<16x150xbf16>, vector<150x128xbf16>, vector<16x128xf32> -> vector<16x128xf32>
    %11 = arith.maximumf %7, %10 : vector<16x128xf32>
    %c3 = arith.constant 3 : index
    %c0_10 = arith.constant 0 : index
    %c0_11 = arith.constant 0 : index
    %12 = vector.load %arg1[%c3, %c0_10, %c0_11] : memref<4x150x128xbf16, #tpu.memory_space<vmem>>, vector<1x150x128xbf16>
    %13 = vector.shape_cast %12 : vector<1x150x128xbf16> to vector<150x128xbf16>
    %cst_12 = arith.constant dense<0.000000e+00> : vector<16x128xf32>
    %14 = tpu.matmul %0, %13, %cst_12 {dimension_numbers = #tpu.dot_dimension_numbers<[1], [0], [0], [1], [0, 0, 1, 1], [], []>} : vector<16x150xbf16>, vector<150x128xbf16>, vector<16x128xf32> -> vector<16x128xf32>
    %15 = arith.maximumf %11, %14 : vector<16x128xf32>
    %c0_13 = arith.constant 0 : index
    %c0_14 = arith.constant 0 : index
    %16 = vector.load %arg3[%c0_13, %c0_14] : memref<16x1xf32, #tpu.memory_space<vmem>>, vector<16x1xf32>
    %17 = vector.broadcast %16 : vector<16x1xf32> to vector<16x128xf32>
    %18 = arith.addf %15, %17 : vector<16x128xf32>
    %cst_15 = arith.constant 0.000000e+00 : f32
    %19 = vector.broadcast %cst_15 : f32 to vector<16x128xf32>
    %20 = arith.maximumf %18, %19 : vector<16x128xf32>
    %21 = arith.truncf %20 : vector<16x128xf32> to vector<16x128xbf16>
    %c0_16 = arith.constant 0 : index
    %c0_17 = arith.constant 0 : index
    %22 = vector.load %arg4[%c0_16, %c0_17] : memref<16x128xbf16, #tpu.memory_space<vmem>>, vector<16x128xbf16>
    tpu.vector_store %arg4[%c0_16, %c0_17], %21 {strides = array<i32>} : memref<16x128xbf16, #tpu.memory_space<vmem>>, vector<16x128xbf16>,
    return
  }
  func.func @transform_0(%arg0: i32) -> (i32, i32, i32) {
    %c0_i32 = arith.constant 0 : i32
    %c0_i32_0 = arith.constant 0 : i32
    %c0_i32_1 = arith.constant 0 : i32
    return %c0_i32, %c0_i32_0, %arg0 : i32, i32, i32
  }
  func.func @transform_1(%arg0: i32) -> (i32, i32) {
    %c0_i32 = arith.constant 0 : i32
    %c0_i32_0 = arith.constant 0 : i32
    %c0_i32_1 = arith.constant 0 : i32
    return %c0_i32, %c0_i32_0 : i32, i32
  }
  func.func @transform_2(%arg0: i32) -> (i32, i32) {
    %c0_i32 = arith.constant 0 : i32
    %c0_i32_0 = arith.constant 0 : i32
    %c0_i32_1 = arith.constant 0 : i32
    return %c0_i32, %c0_i32_0 : i32, i32
  }
  func.func @transform_3(%arg0: i32) -> (i32, i32) {
    %c0_i32 = arith.constant 0 : i32
    %c0_i32_0 = arith.constant 0 : i32
    return %c0_i32, %arg0 : i32, i32
  }
}

module attributes {stable_mosaic.version = 11 : i64} {
  func.func @_mlp_kernel(%arg0: i32, %arg1: memref<8x400xbf16, #tpu.memory_space<vmem>>, %arg2: memref<400x120xbf16, #tpu.memory_space<vmem>>, %arg3: memref<1x120xf32, #tpu.memory_space<vmem>>, %arg4: memref<120x84xbf16, #tpu.memory_space<vmem>>, %arg5: memref<1x84xf32, #tpu.memory_space<vmem>>, %arg6: memref<84x10xbf16, #tpu.memory_space<vmem>>, %arg7: memref<1x10xf32, #tpu.memory_space<vmem>>, %arg8: memref<8x10xf32, #tpu.memory_space<vmem>>) attributes {dimension_semantics = [#tpu.dimension_semantics<parallel>], iteration_bounds = array<i64: 1>, scalar_prefetch = 0 : i64, scratch_operands = 0 : i64, tpu.core_type = #tpu.core_type<tc>, window_params = [{transform_indices = @transform_0, window_bounds = array<i64: 8, 400>}, {pipeline_mode = #tpu.pipeline_mode<synchronous>, transform_indices = @transform_1, window_bounds = array<i64: 400, 120>}, {pipeline_mode = #tpu.pipeline_mode<synchronous>, transform_indices = @transform_2, window_bounds = array<i64: 1, 120>}, {pipeline_mode = #tpu.pipeline_mode<synchronous>, transform_indices = @transform_3, window_bounds = array<i64: 120, 84>}, {pipeline_mode = #tpu.pipeline_mode<synchronous>, transform_indices = @transform_4, window_bounds = array<i64: 1, 84>}, {pipeline_mode = #tpu.pipeline_mode<synchronous>, transform_indices = @transform_5, window_bounds = array<i64: 84, 10>}, {pipeline_mode = #tpu.pipeline_mode<synchronous>, transform_indices = @transform_6, window_bounds = array<i64: 1, 10>}, {transform_indices = @transform_7, window_bounds = array<i64: 8, 10>}]} {
    %c0 = arith.constant 0 : index
    %c0_0 = arith.constant 0 : index
    %0 = vector.load %arg1[%c0, %c0_0] : memref<8x400xbf16, #tpu.memory_space<vmem>>, vector<8x400xbf16>
    %c0_1 = arith.constant 0 : index
    %c0_2 = arith.constant 0 : index
    %1 = vector.load %arg2[%c0_1, %c0_2] : memref<400x120xbf16, #tpu.memory_space<vmem>>, vector<400x120xbf16>
    %cst = arith.constant dense<0.000000e+00> : vector<8x120xf32>
    %2 = tpu.matmul %0, %1, %cst {dimension_numbers = #tpu.dot_dimension_numbers<[1], [0], [0], [1], [0, 0, 1, 1], [], []>} : vector<8x400xbf16>, vector<400x120xbf16>, vector<8x120xf32> -> vector<8x120xf32>
    %c0_3 = arith.constant 0 : index
    %c0_4 = arith.constant 0 : index
    %3 = vector.load %arg3[%c0_3, %c0_4] : memref<1x120xf32, #tpu.memory_space<vmem>>, vector<1x120xf32>
    %4 = vector.broadcast %3 : vector<1x120xf32> to vector<8x120xf32>
    %5 = arith.addf %2, %4 : vector<8x120xf32>
    %cst_5 = arith.constant 0.000000e+00 : f32
    %6 = vector.broadcast %cst_5 : f32 to vector<8x120xf32>
    %7 = arith.maximumf %5, %6 : vector<8x120xf32>
    %8 = arith.truncf %7 : vector<8x120xf32> to vector<8x120xbf16>
    %c0_6 = arith.constant 0 : index
    %c0_7 = arith.constant 0 : index
    %9 = vector.load %arg4[%c0_6, %c0_7] : memref<120x84xbf16, #tpu.memory_space<vmem>>, vector<120x84xbf16>
    %cst_8 = arith.constant dense<0.000000e+00> : vector<8x84xf32>
    %10 = tpu.matmul %8, %9, %cst_8 {dimension_numbers = #tpu.dot_dimension_numbers<[1], [0], [0], [1], [0, 0, 1, 1], [], []>} : vector<8x120xbf16>, vector<120x84xbf16>, vector<8x84xf32> -> vector<8x84xf32>
    %c0_9 = arith.constant 0 : index
    %c0_10 = arith.constant 0 : index
    %11 = vector.load %arg5[%c0_9, %c0_10] : memref<1x84xf32, #tpu.memory_space<vmem>>, vector<1x84xf32>
    %12 = vector.broadcast %11 : vector<1x84xf32> to vector<8x84xf32>
    %13 = arith.addf %10, %12 : vector<8x84xf32>
    %cst_11 = arith.constant 0.000000e+00 : f32
    %14 = vector.broadcast %cst_11 : f32 to vector<8x84xf32>
    %15 = arith.maximumf %13, %14 : vector<8x84xf32>
    %16 = arith.truncf %15 : vector<8x84xf32> to vector<8x84xbf16>
    %c0_12 = arith.constant 0 : index
    %c0_13 = arith.constant 0 : index
    %17 = vector.load %arg6[%c0_12, %c0_13] : memref<84x10xbf16, #tpu.memory_space<vmem>>, vector<84x10xbf16>
    %cst_14 = arith.constant dense<0.000000e+00> : vector<8x10xf32>
    %18 = tpu.matmul %16, %17, %cst_14 {dimension_numbers = #tpu.dot_dimension_numbers<[1], [0], [0], [1], [0, 0, 1, 1], [], []>} : vector<8x84xbf16>, vector<84x10xbf16>, vector<8x10xf32> -> vector<8x10xf32>
    %c0_15 = arith.constant 0 : index
    %c0_16 = arith.constant 0 : index
    %19 = vector.load %arg7[%c0_15, %c0_16] : memref<1x10xf32, #tpu.memory_space<vmem>>, vector<1x10xf32>
    %20 = vector.broadcast %19 : vector<1x10xf32> to vector<8x10xf32>
    %21 = arith.addf %18, %20 : vector<8x10xf32>
    %c0_17 = arith.constant 0 : index
    %c0_18 = arith.constant 0 : index
    %22 = vector.load %arg8[%c0_17, %c0_18] : memref<8x10xf32, #tpu.memory_space<vmem>>, vector<8x10xf32>
    tpu.vector_store %arg8[%c0_17, %c0_18], %21 {strides = array<i32>} : memref<8x10xf32, #tpu.memory_space<vmem>>, vector<8x10xf32>,
    return
  }
  func.func @transform_0(%arg0: i32) -> (i32, i32) {
    %c0_i32 = arith.constant 0 : i32
    %c0_i32_0 = arith.constant 0 : i32
    return %arg0, %c0_i32 : i32, i32
  }
  func.func @transform_1(%arg0: i32) -> (i32, i32) {
    %c0_i32 = arith.constant 0 : i32
    %c0_i32_0 = arith.constant 0 : i32
    %c0_i32_1 = arith.constant 0 : i32
    return %c0_i32, %c0_i32_0 : i32, i32
  }
  func.func @transform_2(%arg0: i32) -> (i32, i32) {
    %c0_i32 = arith.constant 0 : i32
    %c0_i32_0 = arith.constant 0 : i32
    %c0_i32_1 = arith.constant 0 : i32
    return %c0_i32, %c0_i32_0 : i32, i32
  }
  func.func @transform_3(%arg0: i32) -> (i32, i32) {
    %c0_i32 = arith.constant 0 : i32
    %c0_i32_0 = arith.constant 0 : i32
    %c0_i32_1 = arith.constant 0 : i32
    return %c0_i32, %c0_i32_0 : i32, i32
  }
  func.func @transform_4(%arg0: i32) -> (i32, i32) {
    %c0_i32 = arith.constant 0 : i32
    %c0_i32_0 = arith.constant 0 : i32
    %c0_i32_1 = arith.constant 0 : i32
    return %c0_i32, %c0_i32_0 : i32, i32
  }
  func.func @transform_5(%arg0: i32) -> (i32, i32) {
    %c0_i32 = arith.constant 0 : i32
    %c0_i32_0 = arith.constant 0 : i32
    %c0_i32_1 = arith.constant 0 : i32
    return %c0_i32, %c0_i32_0 : i32, i32
  }
  func.func @transform_6(%arg0: i32) -> (i32, i32) {
    %c0_i32 = arith.constant 0 : i32
    %c0_i32_0 = arith.constant 0 : i32
    %c0_i32_1 = arith.constant 0 : i32
    return %c0_i32, %c0_i32_0 : i32, i32
  }
  func.func @transform_7(%arg0: i32) -> (i32, i32) {
    %c0_i32 = arith.constant 0 : i32
    %c0_i32_0 = arith.constant 0 : i32
    return %arg0, %c0_i32 : i32, i32
  }
}

</mosaic_0001>

<llo_original>
// kernel: lenet_forward_pallas.3
$region0: #{lenet_forward_pallas.3}
  #allocation0 [shape = 'u32[]', space=smem, size = 0x4, offset = 0x4, fixed_abs, tag = 'smem constant byte address 0x4 - core index']
  #allocation1 [shape = 'u32[144,128]{1,0:T(1,128)}', space=vmem, size = 0x12000, scoped, tag = 'internal scratch']
  %s0 = inlined_call_operand.vmem [shape: bf16[4,75,512], index: 0, kind: input, shape index: {}]
  %s1 = inlined_call_operand.vmem [shape: bf16[6,75], index: 1, kind: input, shape index: {}]
  %s2 = inlined_call_operand.vmem [shape: f32[6,1], index: 2, kind: input, shape index: {}]
  %s3 = inlined_call_operand.vmem [shape: bf16[6,512], index: 3, kind: output, shape index: {}]
  %s4 = sld [smem:[#allocation0]]
  $region22: #{lenet_forward_pallas.3} parent=0
    _
  %s6 = ssub.s32 1, %s4
  %s7 = scalar_select 0, %s6, %s4
  // Predicated region
  $region2: #{lenet_forward_pallas.3} parent=0 // pred_check
    _
  $region3: #{lenet_forward_pallas.3} parent=0 // pred_check_branch
    %9 = sbr.rel (0) target = $region5
  $region4: #{lenet_forward_pallas.3} parent=0 // pred_region
    _
  $region5: #{lenet_forward_pallas.3} parent=0 // pred_fallthru
    _
  // Predicated region
  $region6: #{lenet_forward_pallas.3} parent=0 // pred_check
    _
  $region7: #{lenet_forward_pallas.3} parent=0 // pred_check_branch
    %11 = sbr.rel (0) target = $region9
  $region8: #{lenet_forward_pallas.3} parent=0 // pred_region
    _
  $region9: #{lenet_forward_pallas.3} parent=0 // pred_fallthru
    _
  // Predicated region
  $region10: #{lenet_forward_pallas.3} parent=0 // pred_check
    _
  $region11: #{lenet_forward_pallas.3} parent=0 // pred_check_branch
    %13 = sbr.rel (0) target = $region13
  $region12: #{lenet_forward_pallas.3} parent=0 // pred_region
    _
  $region13: #{lenet_forward_pallas.3} parent=0 // pred_fallthru
    _
  %v15 = vld [vmem:[%s1] sm:$0x7]
  %v16 = vld [vmem:[%s0] sm:$0xff]
  %v17 = vld [vmem:[%s0 + $0x8] sm:$0xff]
  %v18 = vld [vmem:[%s0 + $0x10] sm:$0xff]
  %v19 = vld [vmem:[%s0 + $0x18] sm:$0xff]
  %v20 = vld [vmem:[%s0 + $0x20] sm:$0xff]
  %v21 = vld [vmem:[%s0 + $0x28] sm:$0xff]
  %v22 = vld [vmem:[%s0 + $0x30] sm:$0xff]
  %v23 = vld [vmem:[%s0 + $0x38] sm:$0xff]
  %v24 = vld [vmem:[%s0 + $0x40] sm:$0xff]
  %v25 = vld [vmem:[%s0 + $0x48] sm:$0xff]
  %v26 = vld [vmem:[%s0 + $0x50] sm:$0xff]
  %v27 = vld [vmem:[%s0 + $0x58] sm:$0xff]
  %v28 = vld [vmem:[%s0 + $0x60] sm:$0xff]
  %v29 = vld [vmem:[%s0 + $0x68] sm:$0xff]
  %v30 = vld [vmem:[%s0 + $0x70] sm:$0xff]
  %v31 = vld [vmem:[%s0 + $0x78] sm:$0xff]
  %v32 = vld [vmem:[%s0 + $0x80] sm:$0xff]
  %v33 = vld [vmem:[%s0 + $0x88] sm:$0xff]
  %v34 = vld [vmem:[%s0 + $0x90] sm:$0x33]
  %v35 = vld [vmem:[%s0 + $0x98] sm:$0x33]
  %v56 = vunpack.c.l.b16 %v16
  %v57 = vunpack.c.h.b16 %v16
  %v58 = vunpack.c.l.b16 %v17
  %v59 = vunpack.c.h.b16 %v17
  %v60 = vunpack.c.l.b16 %v18
  %v61 = vunpack.c.h.b16 %v18
  %v62 = vunpack.c.l.b16 %v19
  %v63 = vunpack.c.h.b16 %v19
  %v64 = vunpack.c.l.b16 %v20
  %v65 = vunpack.c.h.b16 %v20
  %v66 = vunpack.c.l.b16 %v21
  %v67 = vunpack.c.h.b16 %v21
  %v68 = vunpack.c.l.b16 %v22
  %v69 = vunpack.c.h.b16 %v22
  %v70 = vunpack.c.l.b16 %v23
  %v71 = vunpack.c.h.b16 %v23
  %v72 = vunpack.c.l.b16 %v24
  %v73 = vunpack.c.h.b16 %v24
  %v74 = vunpack.c.l.b16 %v25
  %v75 = vunpack.c.h.b16 %v25
  %v76 = vunpack.c.l.b16 %v26
  %v77 = vunpack.c.h.b16 %v26
  %v78 = vunpack.c.l.b16 %v27
  %v79 = vunpack.c.h.b16 %v27
  %v80 = vunpack.c.l.b16 %v28
  %v81 = vunpack.c.h.b16 %v28
  %v82 = vunpack.c.l.b16 %v29
  %v83 = vunpack.c.h.b16 %v29
  %v84 = vunpack.c.l.b16 %v30
  %v85 = vunpack.c.h.b16 %v30
  %v86 = vunpack.c.l.b16 %v31
  %v87 = vunpack.c.h.b16 %v31
  %v88 = vunpack.c.l.b16 %v32
  %v89 = vunpack.c.h.b16 %v32
  %v90 = vunpack.c.l.b16 %v33
  %v91 = vunpack.c.h.b16 %v33
  %v92 = vunpack.c.l.b16 %v34
  %v93 = vunpack.c.h.b16 %v34
  %v94 = vunpack.c.l.b16 %v35
  %v95 = vunpack.c.h.b16 %v35
  %v96 = vpack.c.b16 %v60, %v56
  %v97 = vpack.c.b16 %v61, %v57
  %v98 = vpack.c.b16 %v62, %v58
  %v99 = vpack.c.b16 %v63, %v59
  %v100 = vpack.c.b16 %v68, %v64
  %v101 = vpack.c.b16 %v69, %v65
  %v102 = vpack.c.b16 %v70, %v66
  %v103 = vpack.c.b16 %v71, %v67
  %v104 = vpack.c.b16 %v76, %v72
  %v105 = vpack.c.b16 %v77, %v73
  %v106 = vpack.c.b16 %v78, %v74
  %v107 = vpack.c.b16 %v79, %v75
  %v108 = vpack.c.b16 %v84, %v80
  %v109 = vpack.c.b16 %v85, %v81
  %v110 = vpack.c.b16 %v86, %v82
  %v111 = vpack.c.b16 %v87, %v83
  %v112 = vpack.c.b16 %v92, %v88
  %v113 = vpack.c.b16 %v93, %v89
  %v114 = vpack.c.b16 %v94, %v90
  %v115 = vpack.c.b16 %v95, %v91
  %vm132 = vcmask 613376
  %v134 = vsel %vm132, %v15, 0
  %vm136 = vcmask 1044480
  %vm137 = vcmask 1045504
  %v138 = vsel %vm136, 4294967295, 65535
  %v139 = vsel %vm137, %v138, 0
  %v141 = vand.u32 %v112, %v139
  %v144 = vand.u32 %v113, %v139
  %v147 = vand.u32 %v114, %v139
  %v150 = vand.u32 %v115, %v139
  %152 = vmatprep.subr.bf16.mxu0 %v97
  %153 = vmatpush1.bf16.msra.mxu0 %v96
  %154 = vmatprep.subr.bf16.mxu0 %v101
  %155 = vmatpush1.bf16.msra.mxu0 %v100
  %156 = vmatprep.subr.bf16.mxu0 %v105
  %157 = vmatpush1.bf16.msra.mxu0 %v104
  %158 = vmatprep.subr.bf16.mxu0 %v109
  %159 = vmatpush1.bf16.msra.mxu0 %v108
  %160 = vmatprep.subr.bf16.mxu0 %v144
  %161 = vmatpush1.bf16.msra.mxu0 %v141
  %162 = vmatprep.subr.bf16.mxu0 0
  %163 = vmatpush1.bf16.msra.mxu0 0
  %164 = vmatprep.subr.bf16.mxu0 0
  %165 = vmatpush1.bf16.msra.mxu0 0
  %166 = vmatprep.subr.bf16.mxu0 0
  %167 = vmatpush1.bf16.msra.mxu0 0
  %168 = vmatprep.subr.bf16.mxu0 0
  %169 = vmatpush1.bf16.msra.mxu0 0
  %170 = vmatprep.subr.bf16.mxu0 0
  %171 = vmatpush1.bf16.msra.mxu0 0
  %172 = vmatprep.subr.bf16.mxu0 0
  %173 = vmatpush1.bf16.msra.mxu0 0
  %174 = vmatprep.subr.bf16.mxu0 0
  %175 = vmatpush1.bf16.msra.mxu0 0
  %176 = vmatprep.subr.bf16.mxu0 0
  %177 = vmatpush1.bf16.msra.mxu0 0
  %178 = vmatprep.subr.bf16.mxu0 0
  %179 = vmatpush1.bf16.msra.mxu0 0
  %180 = vmatprep.subr.bf16.mxu0 0
  %181 = vmatpush1.bf16.msra.mxu0 0
  %182 = vmatprep.subr.bf16.mxu0 0
  %183 = vmatpush1.bf16.msra.mxu0 0
  %184 = vmatprep.mubr.bf16.mxu0 0
  %185 = vmatmul.mubr.bf16.gmra.mrb[0].mxu0 %v134
  %v186 = vpop.f32.mrb[0].mxu0
  %v187 = vadd.f32 0.0, %v186
  %v188 = vpop.f32.mrb[0].mxu0
  %v189 = vadd.f32 0.0, %v188
  %v190 = vpop.f32.mrb[0].mxu0
  %v191 = vpop.f32.mrb[0].mxu0
  %192 = vdwg.mxu0
  %193 = vmatprep.subr.bf16.mxu0 %v99
  %194 = vmatpush1.bf16.msra.mxu0 %v98
  %195 = vmatprep.subr.bf16.mxu0 %v103
  %196 = vmatpush1.bf16.msra.mxu0 %v102
  %197 = vmatprep.subr.bf16.mxu0 %v107
  %198 = vmatpush1.bf16.msra.mxu0 %v106
  %199 = vmatprep.subr.bf16.mxu0 %v111
  %200 = vmatpush1.bf16.msra.mxu0 %v110
  %201 = vmatprep.subr.bf16.mxu0 %v150
  %202 = vmatpush1.bf16.msra.mxu0 %v147
  %203 = vmatprep.subr.bf16.mxu0 0
  %204 = vmatpush1.bf16.msra.mxu0 0
  %205 = vmatprep.subr.bf16.mxu0 0
  %206 = vmatpush1.bf16.msra.mxu0 0
  %207 = vmatprep.subr.bf16.mxu0 0
  %208 = vmatpush1.bf16.msra.mxu0 0
  %209 = vmatprep.subr.bf16.mxu0 0
  %210 = vmatpush1.bf16.msra.mxu0 0
  %211 = vmatprep.subr.bf16.mxu0 0
  %212 = vmatpush1.bf16.msra.mxu0 0
  %213 = vmatprep.subr.bf16.mxu0 0
  %214 = vmatpush1.bf16.msra.mxu0 0
  %215 = vmatprep.subr.bf16.mxu0 0
  %216 = vmatpush1.bf16.msra.mxu0 0
  %217 = vmatprep.subr.bf16.mxu0 0
  %218 = vmatpush1.bf16.msra.mxu0 0
  %219 = vmatprep.subr.bf16.mxu0 0
  %220 = vmatpush1.bf16.msra.mxu0 0
  %221 = vmatprep.subr.bf16.mxu0 0
  %222 = vmatpush1.bf16.msra.mxu0 0
  %223 = vmatprep.subr.bf16.mxu0 0
  %224 = vmatpush1.bf16.msra.mxu0 0
  %225 = vmatprep.mubr.bf16.mxu0 0
  %226 = vmatmul.mubr.bf16.gmra.mrb[0].mxu0 %v134
  %v227 = vpop.f32.mrb[0].mxu0
  %v228 = vadd.f32 0.0, %v227
  %v229 = vpop.f32.mrb[0].mxu0
  %v230 = vadd.f32 0.0, %v229
  %v231 = vpop.f32.mrb[0].mxu0
  %v232 = vpop.f32.mrb[0].mxu0
  %233 = vdwg.mxu0
  %s234 = scalar_lea.vmem %s0, 160
  %v235 = vld [vmem:[%s234] sm:$0xff]
  %v236 = vld [vmem:[%s234 + $0x8] sm:$0xff]
  %v237 = vld [vmem:[%s234 + $0x10] sm:$0xff]
  %v238 = vld [vmem:[%s234 + $0x18] sm:$0xff]
  %v239 = vld [vmem:[%s234 + $0x20] sm:$0xff]
  %v240 = vld [vmem:[%s234 + $0x28] sm:$0xff]
  %v241 = vld [vmem:[%s234 + $0x30] sm:$0xff]
  %v242 = vld [vmem:[%s234 + $0x38] sm:$0xff]
  %v243 = vld [vmem:[%s234 + $0x40] sm:$0xff]
  %v244 = vld [vmem:[%s234 + $0x48] sm:$0xff]
  %v245 = vld [vmem:[%s234 + $0x50] sm:$0xff]
  %v246 = vld [vmem:[%s234 + $0x58] sm:$0xff]
  %v247 = vld [vmem:[%s234 + $0x60] sm:$0xff]
  %v248 = vld [vmem:[%s234 + $0x68] sm:$0xff]
  %v249 = vld [vmem:[%s234 + $0x70] sm:$0xff]
  %v250 = vld [vmem:[%s234 + $0x78] sm:$0xff]
  %v251 = vld [vmem:[%s234 + $0x80] sm:$0xff]
  %v252 = vld [vmem:[%s234 + $0x88] sm:$0xff]
  %v253 = vld [vmem:[%s234 + $0x90] sm:$0x33]
  %v254 = vld [vmem:[%s234 + $0x98] sm:$0x33]
  %v275 = vunpack.c.l.b16 %v235
  %v276 = vunpack.c.h.b16 %v235
  %v277 = vunpack.c.l.b16 %v236
  %v278 = vunpack.c.h.b16 %v236
  %v279 = vunpack.c.l.b16 %v237
  %v280 = vunpack.c.h.b16 %v237
  %v281 = vunpack.c.l.b16 %v238
  %v282 = vunpack.c.h.b16 %v238
  %v283 = vunpack.c.l.b16 %v239
  %v284 = vunpack.c.h.b16 %v239
  %v285 = vunpack.c.l.b16 %v240
  %v286 = vunpack.c.h.b16 %v240
  %v287 = vunpack.c.l.b16 %v241
  %v288 = vunpack.c.h.b16 %v241
  %v289 = vunpack.c.l.b16 %v242
  %v290 = vunpack.c.h.b16 %v242
  %v291 = vunpack.c.l.b16 %v243
  %v292 = vunpack.c.h.b16 %v243
  %v293 = vunpack.c.l.b16 %v244
  %v294 = vunpack.c.h.b16 %v244
  %v295 = vunpack.c.l.b16 %v245
  %v296 = vunpack.c.h.b16 %v245
  %v297 = vunpack.c.l.b16 %v246
  %v298 = vunpack.c.h.b16 %v246
  %v299 = vunpack.c.l.b16 %v247
  %v300 = vunpack.c.h.b16 %v247
  %v301 = vunpack.c.l.b16 %v248
  %v302 = vunpack.c.h.b16 %v248
  %v303 = vunpack.c.l.b16 %v249
  %v304 = vunpack.c.h.b16 %v249
  %v305 = vunpack.c.l.b16 %v250
  %v306 = vunpack.c.h.b16 %v250
  %v307 = vunpack.c.l.b16 %v251
  %v308 = vunpack.c.h.b16 %v251
  %v309 = vunpack.c.l.b16 %v252
  %v310 = vunpack.c.h.b16 %v252
  %v311 = vunpack.c.l.b16 %v253
  %v312 = vunpack.c.h.b16 %v253
  %v313 = vunpack.c.l.b16 %v254
  %v314 = vunpack.c.h.b16 %v254
  %v315 = vpack.c.b16 %v279, %v275
  %v316 = vpack.c.b16 %v280, %v276
  %v317 = vpack.c.b16 %v281, %v277
  %v318 = vpack.c.b16 %v282, %v278
  %v319 = vpack.c.b16 %v287, %v283
  %v320 = vpack.c.b16 %v288, %v284
  %v321 = vpack.c.b16 %v289, %v285
  %v322 = vpack.c.b16 %v290, %v286
  %v323 = vpack.c.b16 %v295, %v291
  %v324 = vpack.c.b16 %v296, %v292
  %v325 = vpack.c.b16 %v297, %v293
  %v326 = vpack.c.b16 %v298, %v294
  %v327 = vpack.c.b16 %v303, %v299
  %v328 = vpack.c.b16 %v304, %v300
  %v329 = vpack.c.b16 %v305, %v301
  %v330 = vpack.c.b16 %v306, %v302
  %v331 = vpack.c.b16 %v311, %v307
  %v332 = vpack.c.b16 %v312, %v308
  %v333 = vpack.c.b16 %v313, %v309
  %v334 = vpack.c.b16 %v314, %v310
  %v352 = vand.u32 %v331, %v139
  %v355 = vand.u32 %v332, %v139
  %v358 = vand.u32 %v333, %v139
  %v361 = vand.u32 %v334, %v139
  %363 = vmatprep.subr.bf16.mxu0 %v316
  %364 = vmatpush1.bf16.msra.mxu0 %v315
  %365 = vmatprep.subr.bf16.mxu0 %v320
  %366 = vmatpush1.bf16.msra.mxu0 %v319
  %367 = vmatprep.subr.bf16.mxu0 %v324
  %368 = vmatpush1.bf16.msra.mxu0 %v323
  %369 = vmatprep.subr.bf16.mxu0 %v328
  %370 = vmatpush1.bf16.msra.mxu0 %v327
  %371 = vmatprep.subr.bf16.mxu0 %v355
  %372 = vmatpush1.bf16.msra.mxu0 %v352
  %373 = vmatprep.subr.bf16.mxu0 0
  %374 = vmatpush1.bf16.msra.mxu0 0
  %375 = vmatprep.subr.bf16.mxu0 0
  %376 = vmatpush1.bf16.msra.mxu0 0
  %377 = vmatprep.subr.bf16.mxu0 0
  %378 = vmatpush1.bf16.msra.mxu0 0
  %379 = vmatprep.subr.bf16.mxu0 0
  %380 = vmatpush1.bf16.msra.mxu0 0
  %381 = vmatprep.subr.bf16.mxu0 0
  %382 = vmatpush1.bf16.msra.mxu0 0
  %383 = vmatprep.subr.bf16.mxu0 0
  %384 = vmatpush1.bf16.msra.mxu0 0
  %385 = vmatprep.subr.bf16.mxu0 0
  %386 = vmatpush1.bf16.msra.mxu0 0
  %387 = vmatprep.subr.bf16.mxu0 0
  %388 = vmatpush1.bf16.msra.mxu0 0
  %389 = vmatprep.subr.bf16.mxu0 0
  %390 = vmatpush1.bf16.msra.mxu0 0
  %391 = vmatprep.subr.bf16.mxu0 0
  %392 = vmatpush1.bf16.msra.mxu0 0
  %393 = vmatprep.subr.bf16.mxu0 0
  %394 = vmatpush1.bf16.msra.mxu0 0
  %395 = vmatprep.mubr.bf16.mxu0 0
  %396 = vmatmul.mubr.bf16.gmra.mrb[0].mxu0 %v134
  %v397 = vpop.f32.mrb[0].mxu0
  %v398 = vadd.f32 0.0, %v397
  %v399 = vpop.f32.mrb[0].mxu0
  %v400 = vadd.f32 0.0, %v399
  %v401 = vpop.f32.mrb[0].mxu0
  %v402 = vpop.f32.mrb[0].mxu0
  %403 = vdwg.mxu0
  %404 = vmatprep.subr.bf16.mxu0 %v318
  %405 = vmatpush1.bf16.msra.mxu0 %v317
  %406 = vmatprep.subr.bf16.mxu0 %v322
  %407 = vmatpush1.bf16.msra.mxu0 %v321
  %408 = vmatprep.subr.bf16.mxu0 %v326
  %409 = vmatpush1.bf16.msra.mxu0 %v325
  %410 = vmatprep.subr.bf16.mxu0 %v330
  %411 = vmatpush1.bf16.msra.mxu0 %v329
  %412 = vmatprep.subr.bf16.mxu0 %v361
  %413 = vmatpush1.bf16.msra.mxu0 %v358
  %414 = vmatprep.subr.bf16.mxu0 0
  %415 = vmatpush1.bf16.msra.mxu0 0
  %416 = vmatprep.subr.bf16.mxu0 0
  %417 = vmatpush1.bf16.msra.mxu0 0
  %418 = vmatprep.subr.bf16.mxu0 0
  %419 = vmatpush1.bf16.msra.mxu0 0
  %420 = vmatprep.subr.bf16.mxu0 0
  %421 = vmatpush1.bf16.msra.mxu0 0
  %422 = vmatprep.subr.bf16.mxu0 0
  %423 = vmatpush1.bf16.msra.mxu0 0
  %424 = vmatprep.subr.bf16.mxu0 0
  %425 = vmatpush1.bf16.msra.mxu0 0
  %426 = vmatprep.subr.bf16.mxu0 0
  %427 = vmatpush1.bf16.msra.mxu0 0
  %428 = vmatprep.subr.bf16.mxu0 0
  %429 = vmatpush1.bf16.msra.mxu0 0
  %430 = vmatprep.subr.bf16.mxu0 0
  %431 = vmatpush1.bf16.msra.mxu0 0
  %432 = vmatprep.subr.bf16.mxu0 0
  %433 = vmatpush1.bf16.msra.mxu0 0
  %434 = vmatprep.subr.bf16.mxu0 0
  %435 = vmatpush1.bf16.msra.mxu0 0
  %436 = vmatprep.mubr.bf16.mxu0 0
  %437 = vmatmul.mubr.bf16.gmra.mrb[0].mxu0 %v134
  %v438 = vpop.f32.mrb[0].mxu0
  %v439 = vadd.f32 0.0, %v438
  %v440 = vpop.f32.mrb[0].mxu0
  %v441 = vadd.f32 0.0, %v440
  %v442 = vpop.f32.mrb[0].mxu0
  %v443 = vpop.f32.mrb[0].mxu0
  %444 = vdwg.mxu0
  %v445 = vmax.f32 %v187, %v398
  %v446 = vmax.f32 %v189, %v400
  %v447 = vmax.f32 %v228, %v439
  %v448 = vmax.f32 %v230, %v441
  %s449 = scalar_lea.vmem %s0, 320
  %v450 = vld [vmem:[%s449] sm:$0xff]
  %v451 = vld [vmem:[%s449 + $0x8] sm:$0xff]
  %v452 = vld [vmem:[%s449 + $0x10] sm:$0xff]
  %v453 = vld [vmem:[%s449 + $0x18] sm:$0xff]
  %v454 = vld [vmem:[%s449 + $0x20] sm:$0xff]
  %v455 = vld [vmem:[%s449 + $0x28] sm:$0xff]
  %v456 = vld [vmem:[%s449 + $0x30] sm:$0xff]
  %v457 = vld [vmem:[%s449 + $0x38] sm:$0xff]
  %v458 = vld [vmem:[%s449 + $0x40] sm:$0xff]
  %v459 = vld [vmem:[%s449 + $0x48] sm:$0xff]
  %v460 = vld [vmem:[%s449 + $0x50] sm:$0xff]
  %v461 = vld [vmem:[%s449 + $0x58] sm:$0xff]
  %v462 = vld [vmem:[%s449 + $0x60] sm:$0xff]
  %v463 = vld [vmem:[%s449 + $0x68] sm:$0xff]
  %v464 = vld [vmem:[%s449 + $0x70] sm:$0xff]
  %v465 = vld [vmem:[%s449 + $0x78] sm:$0xff]
  %v466 = vld [vmem:[%s449 + $0x80] sm:$0xff]
  %v467 = vld [vmem:[%s449 + $0x88] sm:$0xff]
  %v468 = vld [vmem:[%s449 + $0x90] sm:$0x33]
  %v469 = vld [vmem:[%s449 + $0x98] sm:$0x33]
  %v490 = vunpack.c.l.b16 %v450
  %v491 = vunpack.c.h.b16 %v450
  %v492 = vunpack.c.l.b16 %v451
  %v493 = vunpack.c.h.b16 %v451
  %v494 = vunpack.c.l.b16 %v452
  %v495 = vunpack.c.h.b16 %v452
  %v496 = vunpack.c.l.b16 %v453
  %v497 = vunpack.c.h.b16 %v453
  %v498 = vunpack.c.l.b16 %v454
  %v499 = vunpack.c.h.b16 %v454
  %v500 = vunpack.c.l.b16 %v455
  %v501 = vunpack.c.h.b16 %v455
  %v502 = vunpack.c.l.b16 %v456
  %v503 = vunpack.c.h.b16 %v456
  %v504 = vunpack.c.l.b16 %v457
  %v505 = vunpack.c.h.b16 %v457
  %v506 = vunpack.c.l.b16 %v458
  %v507 = vunpack.c.h.b16 %v458
  %v508 = vunpack.c.l.b16 %v459
  %v509 = vunpack.c.h.b16 %v459
  %v510 = vunpack.c.l.b16 %v460
  %v511 = vunpack.c.h.b16 %v460
  %v512 = vunpack.c.l.b16 %v461
  %v513 = vunpack.c.h.b16 %v461
  %v514 = vunpack.c.l.b16 %v462
  %v515 = vunpack.c.h.b16 %v462
  %v516 = vunpack.c.l.b16 %v463
  %v517 = vunpack.c.h.b16 %v463
  %v518 = vunpack.c.l.b16 %v464
  %v519 = vunpack.c.h.b16 %v464
  %v520 = vunpack.c.l.b16 %v465
  %v521 = vunpack.c.h.b16 %v465
  %v522 = vunpack.c.l.b16 %v466
  %v523 = vunpack.c.h.b16 %v466
  %v524 = vunpack.c.l.b16 %v467
  %v525 = vunpack.c.h.b16 %v467
  %v526 = vunpack.c.l.b16 %v468
  %v527 = vunpack.c.h.b16 %v468
  %v528 = vunpack.c.l.b16 %v469
  %v529 = vunpack.c.h.b16 %v469
  %v530 = vpack.c.b16 %v494, %v490
  %v531 = vpack.c.b16 %v495, %v491
  %v532 = vpack.c.b16 %v496, %v492
  %v533 = vpack.c.b16 %v497, %v493
  %v534 = vpack.c.b16 %v502, %v498
  %v535 = vpack.c.b16 %v503, %v499
  %v536 = vpack.c.b16 %v504, %v500
  %v537 = vpack.c.b16 %v505, %v501
  %v538 = vpack.c.b16 %v510, %v506
  %v539 = vpack.c.b16 %v511, %v507
  %v540 = vpack.c.b16 %v512, %v508
  %v541 = vpack.c.b16 %v513, %v509
  %v542 = vpack.c.b16 %v518, %v514
  %v543 = vpack.c.b16 %v519, %v515
  %v544 = vpack.c.b16 %v520, %v516
  %v545 = vpack.c.b16 %v521, %v517
  %v546 = vpack.c.b16 %v526, %v522
  %v547 = vpack.c.b16 %v527, %v523
  %v548 = vpack.c.b16 %v528, %v524
  %v549 = vpack.c.b16 %v529, %v525
  %v567 = vand.u32 %v546, %v139
  %v570 = vand.u32 %v547, %v139
  %v573 = vand.u32 %v548, %v139
  %v576 = vand.u32 %v549, %v139
  %578 = vmatprep.subr.bf16.mxu0 %v531
  %579 = vmatpush1.bf16.msra.mxu0 %v530
  %580 = vmatprep.subr.bf16.mxu0 %v535
  %581 = vmatpush1.bf16.msra.mxu0 %v534
  %582 = vmatprep.subr.bf16.mxu0 %v539
  %583 = vmatpush1.bf16.msra.mxu0 %v538
  %584 = vmatprep.subr.bf16.mxu0 %v543
  %585 = vmatpush1.bf16.msra.mxu0 %v542
  %586 = vmatprep.subr.bf16.mxu0 %v570
  %587 = vmatpush1.bf16.msra.mxu0 %v567
  %588 = vmatprep.subr.bf16.mxu0 0
  %589 = vmatpush1.bf16.msra.mxu0 0
  %590 = vmatprep.subr.bf16.mxu0 0
  %591 = vmatpush1.bf16.msra.mxu0 0
  %592 = vmatprep.subr.bf16.mxu0 0
  %593 = vmatpush1.bf16.msra.mxu0 0
  %594 = vmatprep.subr.bf16.mxu0 0
  %595 = vmatpush1.bf16.msra.mxu0 0
  %596 = vmatprep.subr.bf16.mxu0 0
  %597 = vmatpush1.bf16.msra.mxu0 0
  %598 = vmatprep.subr.bf16.mxu0 0
  %599 = vmatpush1.bf16.msra.mxu0 0
  %600 = vmatprep.subr.bf16.mxu0 0
  %601 = vmatpush1.bf16.msra.mxu0 0
  %602 = vmatprep.subr.bf16.mxu0 0
  %603 = vmatpush1.bf16.msra.mxu0 0
  %604 = vmatprep.subr.bf16.mxu0 0
  %605 = vmatpush1.bf16.msra.mxu0 0
  %606 = vmatprep.subr.bf16.mxu0 0
  %607 = vmatpush1.bf16.msra.mxu0 0
  %608 = vmatprep.subr.bf16.mxu0 0
  %609 = vmatpush1.bf16.msra.mxu0 0
  %610 = vmatprep.mubr.bf16.mxu0 0
  %611 = vmatmul.mubr.bf16.gmra.mrb[0].mxu0 %v134
  %v612 = vpop.f32.mrb[0].mxu0
  %v613 = vadd.f32 0.0, %v612
  %v614 = vpop.f32.mrb[0].mxu0
  %v615 = vadd.f32 0.0, %v614
  %v616 = vpop.f32.mrb[0].mxu0
  %v617 = vpop.f32.mrb[0].mxu0
  %618 = vdwg.mxu0
  %619 = vmatprep.subr.bf16.mxu0 %v533
  %620 = vmatpush1.bf16.msra.mxu0 %v532
  %621 = vmatprep.subr.bf16.mxu0 %v537
  %622 = vmatpush1.bf16.msra.mxu0 %v536
  %623 = vmatprep.subr.bf16.mxu0 %v541
  %624 = vmatpush1.bf16.msra.mxu0 %v540
  %625 = vmatprep.subr.bf16.mxu0 %v545
  %626 = vmatpush1.bf16.msra.mxu0 %v544
  %627 = vmatprep.subr.bf16.mxu0 %v576
  %628 = vmatpush1.bf16.msra.mxu0 %v573
  %629 = vmatprep.subr.bf16.mxu0 0
  %630 = vmatpush1.bf16.msra.mxu0 0
  %631 = vmatprep.subr.bf16.mxu0 0
  %632 = vmatpush1.bf16.msra.mxu0 0
  %633 = vmatprep.subr.bf16.mxu0 0
  %634 = vmatpush1.bf16.msra.mxu0 0
  %635 = vmatprep.subr.bf16.mxu0 0
  %636 = vmatpush1.bf16.msra.mxu0 0
  %637 = vmatprep.subr.bf16.mxu0 0
  %638 = vmatpush1.bf16.msra.mxu0 0
  %639 = vmatprep.subr.bf16.mxu0 0
  %640 = vmatpush1.bf16.msra.mxu0 0
  %641 = vmatprep.subr.bf16.mxu0 0
  %642 = vmatpush1.bf16.msra.mxu0 0
  %643 = vmatprep.subr.bf16.mxu0 0
  %644 = vmatpush1.bf16.msra.mxu0 0
  %645 = vmatprep.subr.bf16.mxu0 0
  %646 = vmatpush1.bf16.msra.mxu0 0
  %647 = vmatprep.subr.bf16.mxu0 0
  %648 = vmatpush1.bf16.msra.mxu0 0
  %649 = vmatprep.subr.bf16.mxu0 0
  %650 = vmatpush1.bf16.msra.mxu0 0
  %651 = vmatprep.mubr.bf16.mxu0 0
  %652 = vmatmul.mubr.bf16.gmra.mrb[0].mxu0 %v134
  %v653 = vpop.f32.mrb[0].mxu0
  %v654 = vadd.f32 0.0, %v653
  %v655 = vpop.f32.mrb[0].mxu0
  %v656 = vadd.f32 0.0, %v655
  %v657 = vpop.f32.mrb[0].mxu0
  %v658 = vpop.f32.mrb[0].mxu0
  %659 = vdwg.mxu0
  %v660 = vmax.f32 %v445, %v613
  %v661 = vmax.f32 %v446, %v615
  %v662 = vmax.f32 %v447, %v654
  %v663 = vmax.f32 %v448, %v656
  %s664 = scalar_lea.vmem %s0, 480
  %v665 = vld [vmem:[%s664] sm:$0xff]
  %v666 = vld [vmem:[%s664 + $0x8] sm:$0xff]
  %v667 = vld [vmem:[%s664 + $0x10] sm:$0xff]
  %v668 = vld [vmem:[%s664 + $0x18] sm:$0xff]
  %v669 = vld [vmem:[%s664 + $0x20] sm:$0xff]
  %v670 = vld [vmem:[%s664 + $0x28] sm:$0xff]
  %v671 = vld [vmem:[%s664 + $0x30] sm:$0xff]
  %v672 = vld [vmem:[%s664 + $0x38] sm:$0xff]
  %v673 = vld [vmem:[%s664 + $0x40] sm:$0xff]
  %v674 = vld [vmem:[%s664 + $0x48] sm:$0xff]
  %v675 = vld [vmem:[%s664 + $0x50] sm:$0xff]
  %v676 = vld [vmem:[%s664 + $0x58] sm:$0xff]
  %v677 = vld [vmem:[%s664 + $0x60] sm:$0xff]
  %v678 = vld [vmem:[%s664 + $0x68] sm:$0xff]
  %v679 = vld [vmem:[%s664 + $0x70] sm:$0xff]
  %v680 = vld [vmem:[%s664 + $0x78] sm:$0xff]
  %v681 = vld [vmem:[%s664 + $0x80] sm:$0xff]
  %v682 = vld [vmem:[%s664 + $0x88] sm:$0xff]
  %v683 = vld [vmem:[%s664 + $0x90] sm:$0x33]
  %v684 = vld [vmem:[%s664 + $0x98] sm:$0x33]
  %v705 = vunpack.c.l.b16 %v665
  %v706 = vunpack.c.h.b16 %v665
  %v707 = vunpack.c.l.b16 %v666
  %v708 = vunpack.c.h.b16 %v666
  %v709 = vunpack.c.l.b16 %v667
  %v710 = vunpack.c.h.b16 %v667
  %v711 = vunpack.c.l.b16 %v668
  %v712 = vunpack.c.h.b16 %v668
  %v713 = vunpack.c.l.b16 %v669
  %v714 = vunpack.c.h.b16 %v669
  %v715 = vunpack.c.l.b16 %v670
  %v716 = vunpack.c.h.b16 %v670
  %v717 = vunpack.c.l.b16 %v671
  %v718 = vunpack.c.h.b16 %v671
  %v719 = vunpack.c.l.b16 %v672
  %v720 = vunpack.c.h.b16 %v672
  %v721 = vunpack.c.l.b16 %v673
  %v722 = vunpack.c.h.b16 %v673
  %v723 = vunpack.c.l.b16 %v674
  %v724 = vunpack.c.h.b16 %v674
  %v725 = vunpack.c.l.b16 %v675
  %v726 = vunpack.c.h.b16 %v675
  %v727 = vunpack.c.l.b16 %v676
  %v728 = vunpack.c.h.b16 %v676
  %v729 = vunpack.c.l.b16 %v677
  %v730 = vunpack.c.h.b16 %v677
  %v731 = vunpack.c.l.b16 %v678
  %v732 = vunpack.c.h.b16 %v678
  %v733 = vunpack.c.l.b16 %v679
  %v734 = vunpack.c.h.b16 %v679
  %v735 = vunpack.c.l.b16 %v680
  %v736 = vunpack.c.h.b16 %v680
  %v737 = vunpack.c.l.b16 %v681
  %v738 = vunpack.c.h.b16 %v681
  %v739 = vunpack.c.l.b16 %v682
  %v740 = vunpack.c.h.b16 %v682
  %v741 = vunpack.c.l.b16 %v683
  %v742 = vunpack.c.h.b16 %v683
  %v743 = vunpack.c.l.b16 %v684
  %v744 = vunpack.c.h.b16 %v684
  %v745 = vpack.c.b16 %v709, %v705
  %v746 = vpack.c.b16 %v710, %v706
  %v747 = vpack.c.b16 %v711, %v707
  %v748 = vpack.c.b16 %v712, %v708
  %v749 = vpack.c.b16 %v717, %v713
  %v750 = vpack.c.b16 %v718, %v714
  %v751 = vpack.c.b16 %v719, %v715
  %v752 = vpack.c.b16 %v720, %v716
  %v753 = vpack.c.b16 %v725, %v721
  %v754 = vpack.c.b16 %v726, %v722
  %v755 = vpack.c.b16 %v727, %v723
  %v756 = vpack.c.b16 %v728, %v724
  %v757 = vpack.c.b16 %v733, %v729
  %v758 = vpack.c.b16 %v734, %v730
  %v759 = vpack.c.b16 %v735, %v731
  %v760 = vpack.c.b16 %v736, %v732
  %v761 = vpack.c.b16 %v741, %v737
  %v762 = vpack.c.b16 %v742, %v738
  %v763 = vpack.c.b16 %v743, %v739
  %v764 = vpack.c.b16 %v744, %v740
  %v782 = vand.u32 %v761, %v139
  %v785 = vand.u32 %v762, %v139
  %v788 = vand.u32 %v763, %v139
  %v791 = vand.u32 %v764, %v139
  %793 = vmatprep.subr.bf16.mxu0 %v746
  %794 = vmatpush1.bf16.msra.mxu0 %v745
  %795 = vmatprep.subr.bf16.mxu0 %v750
  %796 = vmatpush1.bf16.msra.mxu0 %v749
  %797 = vmatprep.subr.bf16.mxu0 %v754
  %798 = vmatpush1.bf16.msra.mxu0 %v753
  %799 = vmatprep.subr.bf16.mxu0 %v758
  %800 = vmatpush1.bf16.msra.mxu0 %v757
  %801 = vmatprep.subr.bf16.mxu0 %v785
  %802 = vmatpush1.bf16.msra.mxu0 %v782
  %803 = vmatprep.subr.bf16.mxu0 0
  %804 = vmatpush1.bf16.msra.mxu0 0
  %805 = vmatprep.subr.bf16.mxu0 0
  %806 = vmatpush1.bf16.msra.mxu0 0
  %807 = vmatprep.subr.bf16.mxu0 0
  %808 = vmatpush1.bf16.msra.mxu0 0
  %809 = vmatprep.subr.bf16.mxu0 0
  %810 = vmatpush1.bf16.msra.mxu0 0
  %811 = vmatprep.subr.bf16.mxu0 0
  %812 = vmatpush1.bf16.msra.mxu0 0
  %813 = vmatprep.subr.bf16.mxu0 0
  %814 = vmatpush1.bf16.msra.mxu0 0
  %815 = vmatprep.subr.bf16.mxu0 0
  %816 = vmatpush1.bf16.msra.mxu0 0
  %817 = vmatprep.subr.bf16.mxu0 0
  %818 = vmatpush1.bf16.msra.mxu0 0
  %819 = vmatprep.subr.bf16.mxu0 0
  %820 = vmatpush1.bf16.msra.mxu0 0
  %821 = vmatprep.subr.bf16.mxu0 0
  %822 = vmatpush1.bf16.msra.mxu0 0
  %823 = vmatprep.subr.bf16.mxu0 0
  %824 = vmatpush1.bf16.msra.mxu0 0
  %825 = vmatprep.mubr.bf16.mxu0 0
  %826 = vmatmul.mubr.bf16.gmra.mrb[0].mxu0 %v134
  %v827 = vpop.f32.mrb[0].mxu0
  %v828 = vadd.f32 0.0, %v827
  %v829 = vpop.f32.mrb[0].mxu0
  %v830 = vadd.f32 0.0, %v829
  %v831 = vpop.f32.mrb[0].mxu0
  %v832 = vpop.f32.mrb[0].mxu0
  %833 = vdwg.mxu0
  %834 = vmatprep.subr.bf16.mxu0 %v748
  %835 = vmatpush1.bf16.msra.mxu0 %v747
  %836 = vmatprep.subr.bf16.mxu0 %v752
  %837 = vmatpush1.bf16.msra.mxu0 %v751
  %838 = vmatprep.subr.bf16.mxu0 %v756
  %839 = vmatpush1.bf16.msra.mxu0 %v755
  %840 = vmatprep.subr.bf16.mxu0 %v760
  %841 = vmatpush1.bf16.msra.mxu0 %v759
  %842 = vmatprep.subr.bf16.mxu0 %v791
  %843 = vmatpush1.bf16.msra.mxu0 %v788
  %844 = vmatprep.subr.bf16.mxu0 0
  %845 = vmatpush1.bf16.msra.mxu0 0
  %846 = vmatprep.subr.bf16.mxu0 0
  %847 = vmatpush1.bf16.msra.mxu0 0
  %848 = vmatprep.subr.bf16.mxu0 0
  %849 = vmatpush1.bf16.msra.mxu0 0
  %850 = vmatprep.subr.bf16.mxu0 0
  %851 = vmatpush1.bf16.msra.mxu0 0
  %852 = vmatprep.subr.bf16.mxu0 0
  %853 = vmatpush1.bf16.msra.mxu0 0
  %854 = vmatprep.subr.bf16.mxu0 0
  %855 = vmatpush1.bf16.msra.mxu0 0
  %856 = vmatprep.subr.bf16.mxu0 0
  %857 = vmatpush1.bf16.msra.mxu0 0
  %858 = vmatprep.subr.bf16.mxu0 0
  %859 = vmatpush1.bf16.msra.mxu0 0
  %860 = vmatprep.subr.bf16.mxu0 0
  %861 = vmatpush1.bf16.msra.mxu0 0
  %862 = vmatprep.subr.bf16.mxu0 0
  %863 = vmatpush1.bf16.msra.mxu0 0
  %864 = vmatprep.subr.bf16.mxu0 0
  %865 = vmatpush1.bf16.msra.mxu0 0
  %866 = vmatprep.mubr.bf16.mxu0 0
  %867 = vmatmul.mubr.bf16.gmra.mrb[0].mxu0 %v134
  %v868 = vpop.f32.mrb[0].mxu0
  %v869 = vadd.f32 0.0, %v868
  %v870 = vpop.f32.mrb[0].mxu0
  %v871 = vadd.f32 0.0, %v870
  %v872 = vpop.f32.mrb[0].mxu0
  %v873 = vpop.f32.mrb[0].mxu0
  %874 = vdwg.mxu0
  %v875 = vmax.f32 %v660, %v828
  %v876 = vmax.f32 %v661, %v830
  %v877 = vmax.f32 %v662, %v869
  %v878 = vmax.f32 %v663, %v871
  %v879 = vld [vmem:[%s2] sm:$0x3f]
  %881 = vset.pattern.permute.xlu0 0
  %882 = vperm.xlu0 %881, %v879
  %v883 = vpop.permute.xlu0 %882
  %v885 = vadd.f32 %v875, %v883
  %v886 = vadd.f32 %v876, %v883
  %v887 = vadd.f32 %v877, %v883
  %v888 = vadd.f32 %v878, %v883
  %v889 = vmax.f32 %v885, 0.0
  %v890 = vmax.f32 %v886, 0.0
  %v891 = vmax.f32 %v887, 0.0
  %v892 = vmax.f32 %v888, 0.0
  %v893 = vpack.c.bf16 %v889, %v889
  %v894 = vpack.c.bf16 %v890, %v890
  %v895 = vpack.c.bf16 %v891, %v891
  %v896 = vpack.c.bf16 %v892, %v892
  %v901 = vunpack.c.l.b16 %v893
  %v902 = vunpack.c.l.b16 %v894
  %v903 = vunpack.c.l.b16 %v895
  %v904 = vunpack.c.l.b16 %v896
  %v905 = vpack.c.b16 %v902, %v901
  %v906 = vpack.c.b16 %v904, %v903
  %909 = vst [vmem:[%s3] sm:$0x77] %v905
  %910 = vst [vmem:[%s3 + $0x8] sm:$0x77] %v906
  // Predicated region
  $region14: #{lenet_forward_pallas.3} parent=0 // pred_check
    _
  $region15: #{lenet_forward_pallas.3} parent=0 // pred_check_branch
    %912 = sbr.rel (0) target = $region17
  $region16: #{lenet_forward_pallas.3} parent=0 // pred_region
    _
  $region17: #{lenet_forward_pallas.3} parent=0 // pred_fallthru
    _
  // Predicated region
  $region18: #{lenet_forward_pallas.3} parent=0 // pred_check
    _
  $region19: #{lenet_forward_pallas.3} parent=0 // pred_check_branch
    %914 = sbr.rel (0) target = $region21
  $region20: #{lenet_forward_pallas.3} parent=0 // pred_region
    _
  $region21: #{lenet_forward_pallas.3} parent=0 // pred_fallthru
    _

// kernel: lenet_forward_pallas.4
$region0: #{lenet_forward_pallas.4}
  #allocation0 [shape = 'u32[]', space=smem, size = 0x4, offset = 0x4, fixed_abs, tag = 'smem constant byte address 0x4 - core index']
  #allocation1 [shape = 'u32[144,128]{1,0:T(1,128)}', space=vmem, size = 0x12000, scoped, tag = 'internal scratch']
  %s0 = inlined_call_operand.vmem [shape: bf16[4,150,128], index: 0, kind: input, shape index: {}]
  %s1 = inlined_call_operand.vmem [shape: bf16[16,150], index: 1, kind: input, shape index: {}]
  %s2 = inlined_call_operand.vmem [shape: f32[16,1], index: 2, kind: input, shape index: {}]
  %s3 = inlined_call_operand.vmem [shape: bf16[16,128], index: 3, kind: output, shape index: {}]
  %s4 = sld [smem:[#allocation0]]
  $region22: #{lenet_forward_pallas.4} parent=0
    _
  %s6 = ssub.s32 1, %s4
  %s7 = scalar_select 0, %s6, %s4
  // Predicated region
  $region2: #{lenet_forward_pallas.4} parent=0 // pred_check
    _
  $region3: #{lenet_forward_pallas.4} parent=0 // pred_check_branch
    %9 = sbr.rel (0) target = $region5
  $region4: #{lenet_forward_pallas.4} parent=0 // pred_region
    _
  $region5: #{lenet_forward_pallas.4} parent=0 // pred_fallthru
    _
  // Predicated region
  $region6: #{lenet_forward_pallas.4} parent=0 // pred_check
    _
  $region7: #{lenet_forward_pallas.4} parent=0 // pred_check_branch
    %11 = sbr.rel (0) target = $region9
  $region8: #{lenet_forward_pallas.4} parent=0 // pred_region
    _
  $region9: #{lenet_forward_pallas.4} parent=0 // pred_fallthru
    _
  // Predicated region
  $region10: #{lenet_forward_pallas.4} parent=0 // pred_check
    _
  $region11: #{lenet_forward_pallas.4} parent=0 // pred_check_branch
    %13 = sbr.rel (0) target = $region13
  $region12: #{lenet_forward_pallas.4} parent=0 // pred_region
    _
  $region13: #{lenet_forward_pallas.4} parent=0 // pred_fallthru
    _
  %v15 = vld [vmem:[%s1] sm:$0xff]
  %v16 = vld [vmem:[%s1 + $0x8] sm:$0xff]
  %v17 = vld [vmem:[%s0] sm:$0xf]
  %v18 = vld [vmem:[%s0 + $0x4] sm:$0xf]
  %v19 = vld [vmem:[%s0 + $0x8] sm:$0xf]
  %v20 = vld [vmem:[%s0 + $0xc] sm:$0xf]
  %v21 = vld [vmem:[%s0 + $0x10] sm:$0xf]
  %v22 = vld [vmem:[%s0 + $0x14] sm:$0xf]
  %v23 = vld [vmem:[%s0 + $0x18] sm:$0xf]
  %v24 = vld [vmem:[%s0 + $0x1c] sm:$0xf]
  %v25 = vld [vmem:[%s0 + $0x20] sm:$0xf]
  %v26 = vld [vmem:[%s0 + $0x24] sm:$0xf]
  %v27 = vld [vmem:[%s0 + $0x28] sm:$0xf]
  %v28 = vld [vmem:[%s0 + $0x2c] sm:$0xf]
  %v29 = vld [vmem:[%s0 + $0x30] sm:$0xf]
  %v30 = vld [vmem:[%s0 + $0x34] sm:$0xf]
  %v31 = vld [vmem:[%s0 + $0x38] sm:$0xf]
  %v32 = vld [vmem:[%s0 + $0x3c] sm:$0xf]
  %v33 = vld [vmem:[%s0 + $0x40] sm:$0xf]
  %v34 = vld [vmem:[%s0 + $0x44] sm:$0xf]
  %v35 = vld [vmem:[%s0 + $0x48] sm:$0x7]
  %v38 = vunpack.c.l.b16 %v15
  %v39 = vunpack.c.h.b16 %v15
  %v40 = vunpack.c.l.b16 %v16
  %v41 = vunpack.c.h.b16 %v16
  %v42 = vpack.c.b16 %v40, %v38
  %v43 = vpack.c.b16 %v41, %v39
  %v64 = vunpack.c.l.b16 %v17
  %v65 = vunpack.c.l.b16 %v18
  %v66 = vunpack.c.l.b16 %v19
  %v67 = vunpack.c.l.b16 %v20
  %v68 = vunpack.c.l.b16 %v21
  %v69 = vunpack.c.l.b16 %v22
  %v70 = vunpack.c.l.b16 %v23
  %v71 = vunpack.c.l.b16 %v24
  %v72 = vunpack.c.l.b16 %v25
  %v73 = vunpack.c.l.b16 %v26
  %v74 = vunpack.c.l.b16 %v27
  %v75 = vunpack.c.l.b16 %v28
  %v76 = vunpack.c.l.b16 %v29
  %v77 = vunpack.c.l.b16 %v30
  %v78 = vunpack.c.l.b16 %v31
  %v79 = vunpack.c.l.b16 %v32
  %v80 = vunpack.c.l.b16 %v33
  %v81 = vunpack.c.l.b16 %v34
  %v82 = vunpack.c.l.b16 %v35
  %v83 = vpack.c.b16 %v65, %v64
  %v84 = vpack.c.b16 %v67, %v66
  %v85 = vpack.c.b16 %v69, %v68
  %v86 = vpack.c.b16 %v71, %v70
  %v87 = vpack.c.b16 %v73, %v72
  %v88 = vpack.c.b16 %v75, %v74
  %v89 = vpack.c.b16 %v77, %v76
  %v90 = vpack.c.b16 %v79, %v78
  %v91 = vpack.c.b16 %v81, %v80
  %v92 = vpack.c.b16 %v82, %v82
  %vm102 = vcmask 179200
  %v104 = vsel %vm102, %v43, 0
  %vm106 = vcmask 1042432
  %v108 = vsel %vm106, %v92, 0
  %110 = vmatprep.subr.bf16.mxu0 0
  %111 = vmatpush1.bf16.msra.mxu0 %v83
  %112 = vmatprep.subr.bf16.mxu0 0
  %113 = vmatpush1.bf16.msra.mxu0 %v84
  %114 = vmatprep.subr.bf16.mxu0 0
  %115 = vmatpush1.bf16.msra.mxu0 %v85
  %116 = vmatprep.subr.bf16.mxu0 0
  %117 = vmatpush1.bf16.msra.mxu0 %v86
  %118 = vmatprep.subr.bf16.mxu0 0
  %119 = vmatpush1.bf16.msra.mxu0 %v87
  %120 = vmatprep.subr.bf16.mxu0 0
  %121 = vmatpush1.bf16.msra.mxu0 %v88
  %122 = vmatprep.subr.bf16.mxu0 0
  %123 = vmatpush1.bf16.msra.mxu0 %v89
  %124 = vmatprep.subr.bf16.mxu0 0
  %125 = vmatpush1.bf16.msra.mxu0 %v90
  %126 = vmatprep.subr.bf16.mxu0 0
  %127 = vmatpush1.bf16.msra.mxu0 %v91
  %128 = vmatprep.subr.bf16.mxu0 0
  %129 = vmatpush1.bf16.msra.mxu0 %v108
  %130 = vmatprep.subr.bf16.mxu0 0
  %131 = vmatpush1.bf16.msra.mxu0 0
  %132 = vmatprep.subr.bf16.mxu0 0
  %133 = vmatpush1.bf16.msra.mxu0 0
  %134 = vmatprep.subr.bf16.mxu0 0
  %135 = vmatpush1.bf16.msra.mxu0 0
  %136 = vmatprep.subr.bf16.mxu0 0
  %137 = vmatpush1.bf16.msra.mxu0 0
  %138 = vmatprep.subr.bf16.mxu0 0
  %139 = vmatpush1.bf16.msra.mxu0 0
  %140 = vmatprep.subr.bf16.mxu0 0
  %141 = vmatpush1.bf16.msra.mxu0 0
  %142 = vmatprep.mubr.bf16.mxu0 %v104
  %143 = vmatmul.mubr.bf16.gmra.mrb[0].mxu0 %v42
  %v144 = vpop.f32.mrb[0].mxu0
  %v145 = vadd.f32 0.0, %v144
  %v146 = vpop.f32.mrb[0].mxu0
  %v147 = vpop.f32.mrb[0].mxu0
  %v148 = vadd.f32 0.0, %v147
  %v149 = vpop.f32.mrb[0].mxu0
  %150 = vdwg.mxu0
  %s151 = scalar_lea.vmem %s0, 76
  %v152 = vld [vmem:[%s151] sm:$0xf]
  %v153 = vld [vmem:[%s151 + $0x4] sm:$0xf]
  %v154 = vld [vmem:[%s151 + $0x8] sm:$0xf]
  %v155 = vld [vmem:[%s151 + $0xc] sm:$0xf]
  %v156 = vld [vmem:[%s151 + $0x10] sm:$0xf]
  %v157 = vld [vmem:[%s151 + $0x14] sm:$0xf]
  %v158 = vld [vmem:[%s151 + $0x18] sm:$0xf]
  %v159 = vld [vmem:[%s151 + $0x1c] sm:$0xf]
  %v160 = vld [vmem:[%s151 + $0x20] sm:$0xf]
  %v161 = vld [vmem:[%s151 + $0x24] sm:$0xf]
  %v162 = vld [vmem:[%s151 + $0x28] sm:$0xf]
  %v163 = vld [vmem:[%s151 + $0x2c] sm:$0xf]
  %v164 = vld [vmem:[%s151 + $0x30] sm:$0xf]
  %v165 = vld [vmem:[%s151 + $0x34] sm:$0xf]
  %v166 = vld [vmem:[%s151 + $0x38] sm:$0xf]
  %v167 = vld [vmem:[%s151 + $0x3c] sm:$0xf]
  %v168 = vld [vmem:[%s151 + $0x40] sm:$0xf]
  %v169 = vld [vmem:[%s151 + $0x44] sm:$0xf]
  %v170 = vld [vmem:[%s151 + $0x48] sm:$0x7]
  %v190 = vunpack.c.l.b16 %v152
  %v191 = vunpack.c.l.b16 %v153
  %v192 = vunpack.c.l.b16 %v154
  %v193 = vunpack.c.l.b16 %v155
  %v194 = vunpack.c.l.b16 %v156
  %v195 = vunpack.c.l.b16 %v157
  %v196 = vunpack.c.l.b16 %v158
  %v197 = vunpack.c.l.b16 %v159
  %v198 = vunpack.c.l.b16 %v160
  %v199 = vunpack.c.l.b16 %v161
  %v200 = vunpack.c.l.b16 %v162
  %v201 = vunpack.c.l.b16 %v163
  %v202 = vunpack.c.l.b16 %v164
  %v203 = vunpack.c.l.b16 %v165
  %v204 = vunpack.c.l.b16 %v166
  %v205 = vunpack.c.l.b16 %v167
  %v206 = vunpack.c.l.b16 %v168
  %v207 = vunpack.c.l.b16 %v169
  %v208 = vunpack.c.l.b16 %v170
  %v209 = vpack.c.b16 %v191, %v190
  %v210 = vpack.c.b16 %v193, %v192
  %v211 = vpack.c.b16 %v195, %v194
  %v212 = vpack.c.b16 %v197, %v196
  %v213 = vpack.c.b16 %v199, %v198
  %v214 = vpack.c.b16 %v201, %v200
  %v215 = vpack.c.b16 %v203, %v202
  %v216 = vpack.c.b16 %v205, %v204
  %v217 = vpack.c.b16 %v207, %v206
  %v218 = vpack.c.b16 %v208, %v208
  %v229 = vsel %vm106, %v218, 0
  %231 = vmatprep.subr.bf16.mxu0 0
  %232 = vmatpush1.bf16.msra.mxu0 %v209
  %233 = vmatprep.subr.bf16.mxu0 0
  %234 = vmatpush1.bf16.msra.mxu0 %v210
  %235 = vmatprep.subr.bf16.mxu0 0
  %236 = vmatpush1.bf16.msra.mxu0 %v211
  %237 = vmatprep.subr.bf16.mxu0 0
  %238 = vmatpush1.bf16.msra.mxu0 %v212
  %239 = vmatprep.subr.bf16.mxu0 0
  %240 = vmatpush1.bf16.msra.mxu0 %v213
  %241 = vmatprep.subr.bf16.mxu0 0
  %242 = vmatpush1.bf16.msra.mxu0 %v214
  %243 = vmatprep.subr.bf16.mxu0 0
  %244 = vmatpush1.bf16.msra.mxu0 %v215
  %245 = vmatprep.subr.bf16.mxu0 0
  %246 = vmatpush1.bf16.msra.mxu0 %v216
  %247 = vmatprep.subr.bf16.mxu0 0
  %248 = vmatpush1.bf16.msra.mxu0 %v217
  %249 = vmatprep.subr.bf16.mxu0 0
  %250 = vmatpush1.bf16.msra.mxu0 %v229
  %251 = vmatprep.subr.bf16.mxu0 0
  %252 = vmatpush1.bf16.msra.mxu0 0
  %253 = vmatprep.subr.bf16.mxu0 0
  %254 = vmatpush1.bf16.msra.mxu0 0
  %255 = vmatprep.subr.bf16.mxu0 0
  %256 = vmatpush1.bf16.msra.mxu0 0
  %257 = vmatprep.subr.bf16.mxu0 0
  %258 = vmatpush1.bf16.msra.mxu0 0
  %259 = vmatprep.subr.bf16.mxu0 0
  %260 = vmatpush1.bf16.msra.mxu0 0
  %261 = vmatprep.subr.bf16.mxu0 0
  %262 = vmatpush1.bf16.msra.mxu0 0
  %263 = vmatprep.mubr.bf16.mxu0 %v104
  %264 = vmatmul.mubr.bf16.gmra.mrb[0].mxu0 %v42
  %v265 = vpop.f32.mrb[0].mxu0
  %v266 = vadd.f32 0.0, %v265
  %v267 = vpop.f32.mrb[0].mxu0
  %v268 = vpop.f32.mrb[0].mxu0
  %v269 = vadd.f32 0.0, %v268
  %v270 = vpop.f32.mrb[0].mxu0
  %271 = vdwg.mxu0
  %v272 = vmax.f32 %v145, %v266
  %v273 = vmax.f32 %v148, %v269
  %s274 = scalar_lea.vmem %s0, 152
  %v275 = vld [vmem:[%s274] sm:$0xf]
  %v276 = vld [vmem:[%s274 + $0x4] sm:$0xf]
  %v277 = vld [vmem:[%s274 + $0x8] sm:$0xf]
  %v278 = vld [vmem:[%s274 + $0xc] sm:$0xf]
  %v279 = vld [vmem:[%s274 + $0x10] sm:$0xf]
  %v280 = vld [vmem:[%s274 + $0x14] sm:$0xf]
  %v281 = vld [vmem:[%s274 + $0x18] sm:$0xf]
  %v282 = vld [vmem:[%s274 + $0x1c] sm:$0xf]
  %v283 = vld [vmem:[%s274 + $0x20] sm:$0xf]
  %v284 = vld [vmem:[%s274 + $0x24] sm:$0xf]
  %v285 = vld [vmem:[%s274 + $0x28] sm:$0xf]
  %v286 = vld [vmem:[%s274 + $0x2c] sm:$0xf]
  %v287 = vld [vmem:[%s274 + $0x30] sm:$0xf]
  %v288 = vld [vmem:[%s274 + $0x34] sm:$0xf]
  %v289 = vld [vmem:[%s274 + $0x38] sm:$0xf]
  %v290 = vld [vmem:[%s274 + $0x3c] sm:$0xf]
  %v291 = vld [vmem:[%s274 + $0x40] sm:$0xf]
  %v292 = vld [vmem:[%s274 + $0x44] sm:$0xf]
  %v293 = vld [vmem:[%s274 + $0x48] sm:$0x7]
  %v313 = vunpack.c.l.b16 %v275
  %v314 = vunpack.c.l.b16 %v276
  %v315 = vunpack.c.l.b16 %v277
  %v316 = vunpack.c.l.b16 %v278
  %v317 = vunpack.c.l.b16 %v279
  %v318 = vunpack.c.l.b16 %v280
  %v319 = vunpack.c.l.b16 %v281
  %v320 = vunpack.c.l.b16 %v282
  %v321 = vunpack.c.l.b16 %v283
  %v322 = vunpack.c.l.b16 %v284
  %v323 = vunpack.c.l.b16 %v285
  %v324 = vunpack.c.l.b16 %v286
  %v325 = vunpack.c.l.b16 %v287
  %v326 = vunpack.c.l.b16 %v288
  %v327 = vunpack.c.l.b16 %v289
  %v328 = vunpack.c.l.b16 %v290
  %v329 = vunpack.c.l.b16 %v291
  %v330 = vunpack.c.l.b16 %v292
  %v331 = vunpack.c.l.b16 %v293
  %v332 = vpack.c.b16 %v314, %v313
  %v333 = vpack.c.b16 %v316, %v315
  %v334 = vpack.c.b16 %v318, %v317
  %v335 = vpack.c.b16 %v320, %v319
  %v336 = vpack.c.b16 %v322, %v321
  %v337 = vpack.c.b16 %v324, %v323
  %v338 = vpack.c.b16 %v326, %v325
  %v339 = vpack.c.b16 %v328, %v327
  %v340 = vpack.c.b16 %v330, %v329
  %v341 = vpack.c.b16 %v331, %v331
  %v352 = vsel %vm106, %v341, 0
  %354 = vmatprep.subr.bf16.mxu0 0
  %355 = vmatpush1.bf16.msra.mxu0 %v332
  %356 = vmatprep.subr.bf16.mxu0 0
  %357 = vmatpush1.bf16.msra.mxu0 %v333
  %358 = vmatprep.subr.bf16.mxu0 0
  %359 = vmatpush1.bf16.msra.mxu0 %v334
  %360 = vmatprep.subr.bf16.mxu0 0
  %361 = vmatpush1.bf16.msra.mxu0 %v335
  %362 = vmatprep.subr.bf16.mxu0 0
  %363 = vmatpush1.bf16.msra.mxu0 %v336
  %364 = vmatprep.subr.bf16.mxu0 0
  %365 = vmatpush1.bf16.msra.mxu0 %v337
  %366 = vmatprep.subr.bf16.mxu0 0
  %367 = vmatpush1.bf16.msra.mxu0 %v338
  %368 = vmatprep.subr.bf16.mxu0 0
  %369 = vmatpush1.bf16.msra.mxu0 %v339
  %370 = vmatprep.subr.bf16.mxu0 0
  %371 = vmatpush1.bf16.msra.mxu0 %v340
  %372 = vmatprep.subr.bf16.mxu0 0
  %373 = vmatpush1.bf16.msra.mxu0 %v352
  %374 = vmatprep.subr.bf16.mxu0 0
  %375 = vmatpush1.bf16.msra.mxu0 0
  %376 = vmatprep.subr.bf16.mxu0 0
  %377 = vmatpush1.bf16.msra.mxu0 0
  %378 = vmatprep.subr.bf16.mxu0 0
  %379 = vmatpush1.bf16.msra.mxu0 0
  %380 = vmatprep.subr.bf16.mxu0 0
  %381 = vmatpush1.bf16.msra.mxu0 0
  %382 = vmatprep.subr.bf16.mxu0 0
  %383 = vmatpush1.bf16.msra.mxu0 0
  %384 = vmatprep.subr.bf16.mxu0 0
  %385 = vmatpush1.bf16.msra.mxu0 0
  %386 = vmatprep.mubr.bf16.mxu0 %v104
  %387 = vmatmul.mubr.bf16.gmra.mrb[0].mxu0 %v42
  %v388 = vpop.f32.mrb[0].mxu0
  %v389 = vadd.f32 0.0, %v388
  %v390 = vpop.f32.mrb[0].mxu0
  %v391 = vpop.f32.mrb[0].mxu0
  %v392 = vadd.f32 0.0, %v391
  %v393 = vpop.f32.mrb[0].mxu0
  %394 = vdwg.mxu0
  %v395 = vmax.f32 %v272, %v389
  %v396 = vmax.f32 %v273, %v392
  %s397 = scalar_lea.vmem %s0, 228
  %v398 = vld [vmem:[%s397] sm:$0xf]
  %v399 = vld [vmem:[%s397 + $0x4] sm:$0xf]
  %v400 = vld [vmem:[%s397 + $0x8] sm:$0xf]
  %v401 = vld [vmem:[%s397 + $0xc] sm:$0xf]
  %v402 = vld [vmem:[%s397 + $0x10] sm:$0xf]
  %v403 = vld [vmem:[%s397 + $0x14] sm:$0xf]
  %v404 = vld [vmem:[%s397 + $0x18] sm:$0xf]
  %v405 = vld [vmem:[%s397 + $0x1c] sm:$0xf]
  %v406 = vld [vmem:[%s397 + $0x20] sm:$0xf]
  %v407 = vld [vmem:[%s397 + $0x24] sm:$0xf]
  %v408 = vld [vmem:[%s397 + $0x28] sm:$0xf]
  %v409 = vld [vmem:[%s397 + $0x2c] sm:$0xf]
  %v410 = vld [vmem:[%s397 + $0x30] sm:$0xf]
  %v411 = vld [vmem:[%s397 + $0x34] sm:$0xf]
  %v412 = vld [vmem:[%s397 + $0x38] sm:$0xf]
  %v413 = vld [vmem:[%s397 + $0x3c] sm:$0xf]
  %v414 = vld [vmem:[%s397 + $0x40] sm:$0xf]
  %v415 = vld [vmem:[%s397 + $0x44] sm:$0xf]
  %v416 = vld [vmem:[%s397 + $0x48] sm:$0x7]
  %v436 = vunpack.c.l.b16 %v398
  %v437 = vunpack.c.l.b16 %v399
  %v438 = vunpack.c.l.b16 %v400
  %v439 = vunpack.c.l.b16 %v401
  %v440 = vunpack.c.l.b16 %v402
  %v441 = vunpack.c.l.b16 %v403
  %v442 = vunpack.c.l.b16 %v404
  %v443 = vunpack.c.l.b16 %v405
  %v444 = vunpack.c.l.b16 %v406
  %v445 = vunpack.c.l.b16 %v407
  %v446 = vunpack.c.l.b16 %v408
  %v447 = vunpack.c.l.b16 %v409
  %v448 = vunpack.c.l.b16 %v410
  %v449 = vunpack.c.l.b16 %v411
  %v450 = vunpack.c.l.b16 %v412
  %v451 = vunpack.c.l.b16 %v413
  %v452 = vunpack.c.l.b16 %v414
  %v453 = vunpack.c.l.b16 %v415
  %v454 = vunpack.c.l.b16 %v416
  %v455 = vpack.c.b16 %v437, %v436
  %v456 = vpack.c.b16 %v439, %v438
  %v457 = vpack.c.b16 %v441, %v440
  %v458 = vpack.c.b16 %v443, %v442
  %v459 = vpack.c.b16 %v445, %v444
  %v460 = vpack.c.b16 %v447, %v446
  %v461 = vpack.c.b16 %v449, %v448
  %v462 = vpack.c.b16 %v451, %v450
  %v463 = vpack.c.b16 %v453, %v452
  %v464 = vpack.c.b16 %v454, %v454
  %v475 = vsel %vm106, %v464, 0
  %477 = vmatprep.subr.bf16.mxu0 0
  %478 = vmatpush1.bf16.msra.mxu0 %v455
  %479 = vmatprep.subr.bf16.mxu0 0
  %480 = vmatpush1.bf16.msra.mxu0 %v456
  %481 = vmatprep.subr.bf16.mxu0 0
  %482 = vmatpush1.bf16.msra.mxu0 %v457
  %483 = vmatprep.subr.bf16.mxu0 0
  %484 = vmatpush1.bf16.msra.mxu0 %v458
  %485 = vmatprep.subr.bf16.mxu0 0
  %486 = vmatpush1.bf16.msra.mxu0 %v459
  %487 = vmatprep.subr.bf16.mxu0 0
  %488 = vmatpush1.bf16.msra.mxu0 %v460
  %489 = vmatprep.subr.bf16.mxu0 0
  %490 = vmatpush1.bf16.msra.mxu0 %v461
  %491 = vmatprep.subr.bf16.mxu0 0
  %492 = vmatpush1.bf16.msra.mxu0 %v462
  %493 = vmatprep.subr.bf16.mxu0 0
  %494 = vmatpush1.bf16.msra.mxu0 %v463
  %495 = vmatprep.subr.bf16.mxu0 0
  %496 = vmatpush1.bf16.msra.mxu0 %v475
  %497 = vmatprep.subr.bf16.mxu0 0
  %498 = vmatpush1.bf16.msra.mxu0 0
  %499 = vmatprep.subr.bf16.mxu0 0
  %500 = vmatpush1.bf16.msra.mxu0 0
  %501 = vmatprep.subr.bf16.mxu0 0
  %502 = vmatpush1.bf16.msra.mxu0 0
  %503 = vmatprep.subr.bf16.mxu0 0
  %504 = vmatpush1.bf16.msra.mxu0 0
  %505 = vmatprep.subr.bf16.mxu0 0
  %506 = vmatpush1.bf16.msra.mxu0 0
  %507 = vmatprep.subr.bf16.mxu0 0
  %508 = vmatpush1.bf16.msra.mxu0 0
  %509 = vmatprep.mubr.bf16.mxu0 %v104
  %510 = vmatmul.mubr.bf16.gmra.mrb[0].mxu0 %v42
  %v511 = vpop.f32.mrb[0].mxu0
  %v512 = vadd.f32 0.0, %v511
  %v513 = vpop.f32.mrb[0].mxu0
  %v514 = vpop.f32.mrb[0].mxu0
  %v515 = vadd.f32 0.0, %v514
  %v516 = vpop.f32.mrb[0].mxu0
  %517 = vdwg.mxu0
  %v518 = vmax.f32 %v395, %v512
  %v519 = vmax.f32 %v396, %v515
  %v520 = vld [vmem:[%s2] sm:$0xff]
  %v521 = vld [vmem:[%s2 + $0x8] sm:$0xff]
  %523 = vset.pattern.permute.xlu0 0
  %524 = vperm.xlu0 %523, %v520
  %v525 = vpop.permute.xlu0 %524
  %528 = vset.pattern.permute.xlu0 0
  %529 = vperm.xlu0 %528, %v521
  %v530 = vpop.permute.xlu0 %529
  %v532 = vadd.f32 %v518, %v525
  %v533 = vadd.f32 %v519, %v530
  %v534 = vmax.f32 %v532, 0.0
  %v535 = vmax.f32 %v533, 0.0
  %v536 = vpack.c.bf16 %v535, %v534
  %v538 = vunpack.c.l.b16 %v536
  %v539 = vunpack.c.h.b16 %v536
  %v540 = vpack.c.b16 %v538, %v538
  %v541 = vpack.c.b16 %v539, %v539
  %544 = vst [vmem:[%s3] sm:$0xf] %v540
  %545 = vst [vmem:[%s3 + $0x4] sm:$0xf] %v541
  // Predicated region
  $region14: #{lenet_forward_pallas.4} parent=0 // pred_check
    _
  $region15: #{lenet_forward_pallas.4} parent=0 // pred_check_branch
    %547 = sbr.rel (0) target = $region17
  $region16: #{lenet_forward_pallas.4} parent=0 // pred_region
    _
  $region17: #{lenet_forward_pallas.4} parent=0 // pred_fallthru
    _
  // Predicated region
  $region18: #{lenet_forward_pallas.4} parent=0 // pred_check
    _
  $region19: #{lenet_forward_pallas.4} parent=0 // pred_check_branch
    %549 = sbr.rel (0) target = $region21
  $region20: #{lenet_forward_pallas.4} parent=0 // pred_region
    _
  $region21: #{lenet_forward_pallas.4} parent=0 // pred_fallthru
    _

// kernel: lenet_forward_pallas.5
$region0: #{lenet_forward_pallas.5}
  #allocation0 [shape = 'u32[]', space=smem, size = 0x4, offset = 0x4, fixed_abs, tag = 'smem constant byte address 0x4 - core index']
  #allocation1 [shape = 'u32[144,128]{1,0:T(1,128)}', space=vmem, size = 0x12000, scoped, tag = 'internal scratch']
  %s0 = inlined_call_operand.vmem [shape: bf16[8,400], index: 0, kind: input, shape index: {}]
  %s1 = inlined_call_operand.vmem [shape: bf16[400,120], index: 1, kind: input, shape index: {}]
  %s2 = inlined_call_operand.vmem [shape: f32[1,120], index: 2, kind: input, shape index: {}]
  %s3 = inlined_call_operand.vmem [shape: bf16[120,84], index: 3, kind: input, shape index: {}]
  %s4 = inlined_call_operand.vmem [shape: f32[1,84], index: 4, kind: input, shape index: {}]
  %s5 = inlined_call_operand.vmem [shape: bf16[84,10], index: 5, kind: input, shape index: {}]
  %s6 = inlined_call_operand.vmem [shape: f32[1,10], index: 6, kind: input, shape index: {}]
  %s7 = inlined_call_operand.vmem [shape: f32[8,10], index: 7, kind: output, shape index: {}]
  %s8 = sld [smem:[#allocation0]]
  $region38: #{lenet_forward_pallas.5} parent=0
    _
  %s10 = ssub.s32 1, %s8
  %s11 = scalar_select 0, %s10, %s8
  // Predicated region
  $region2: #{lenet_forward_pallas.5} parent=0 // pred_check
    _
  $region3: #{lenet_forward_pallas.5} parent=0 // pred_check_branch
    %13 = sbr.rel (0) target = $region5
  $region4: #{lenet_forward_pallas.5} parent=0 // pred_region
    _
  $region5: #{lenet_forward_pallas.5} parent=0 // pred_fallthru
    _
  // Predicated region
  $region6: #{lenet_forward_pallas.5} parent=0 // pred_check
    _
  $region7: #{lenet_forward_pallas.5} parent=0 // pred_check_branch
    %15 = sbr.rel (0) target = $region9
  $region8: #{lenet_forward_pallas.5} parent=0 // pred_region
    _
  $region9: #{lenet_forward_pallas.5} parent=0 // pred_fallthru
    _
  // Predicated region
  $region10: #{lenet_forward_pallas.5} parent=0 // pred_check
    _
  $region11: #{lenet_forward_pallas.5} parent=0 // pred_check_branch
    %17 = sbr.rel (0) target = $region13
  $region12: #{lenet_forward_pallas.5} parent=0 // pred_region
    _
  $region13: #{lenet_forward_pallas.5} parent=0 // pred_fallthru
    _
  // Predicated region
  $region14: #{lenet_forward_pallas.5} parent=0 // pred_check
    _
  $region15: #{lenet_forward_pallas.5} parent=0 // pred_check_branch
    %19 = sbr.rel (0) target = $region17
  $region16: #{lenet_forward_pallas.5} parent=0 // pred_region
    _
  $region17: #{lenet_forward_pallas.5} parent=0 // pred_fallthru
    _
  // Predicated region
  $region18: #{lenet_forward_pallas.5} parent=0 // pred_check
    _
  $region19: #{lenet_forward_pallas.5} parent=0 // pred_check_branch
    %21 = sbr.rel (0) target = $region21
  $region20: #{lenet_forward_pallas.5} parent=0 // pred_region
    _
  $region21: #{lenet_forward_pallas.5} parent=0 // pred_fallthru
    _
  // Predicated region
  $region22: #{lenet_forward_pallas.5} parent=0 // pred_check
    _
  $region23: #{lenet_forward_pallas.5} parent=0 // pred_check_branch
    %23 = sbr.rel (0) target = $region25
  $region24: #{lenet_forward_pallas.5} parent=0 // pred_region
    _
  $region25: #{lenet_forward_pallas.5} parent=0 // pred_fallthru
    _
  // Predicated region
  $region26: #{lenet_forward_pallas.5} parent=0 // pred_check
    _
  $region27: #{lenet_forward_pallas.5} parent=0 // pred_check_branch
    %25 = sbr.rel (0) target = $region29
  $region28: #{lenet_forward_pallas.5} parent=0 // pred_region
    _
  $region29: #{lenet_forward_pallas.5} parent=0 // pred_fallthru
    _
  %v27 = vld [vmem:[%s0] sm:$0xff]
  %v28 = vld [vmem:[%s0 + $0x8] sm:$0xff]
  %v29 = vld [vmem:[%s1] sm:$0xf]
  %v30 = vld [vmem:[%s1 + $0x4] sm:$0xf]
  %v31 = vld [vmem:[%s1 + $0x8] sm:$0xf]
  %v32 = vld [vmem:[%s1 + $0xc] sm:$0xf]
  %v33 = vld [vmem:[%s1 + $0x10] sm:$0xf]
  %v34 = vld [vmem:[%s1 + $0x14] sm:$0xf]
  %v35 = vld [vmem:[%s1 + $0x18] sm:$0xf]
  %v36 = vld [vmem:[%s1 + $0x1c] sm:$0xf]
  %v37 = vld [vmem:[%s1 + $0x20] sm:$0xf]
  %v38 = vld [vmem:[%s1 + $0x24] sm:$0xf]
  %v39 = vld [vmem:[%s1 + $0x28] sm:$0xf]
  %v40 = vld [vmem:[%s1 + $0x2c] sm:$0xf]
  %v41 = vld [vmem:[%s1 + $0x30] sm:$0xf]
  %v42 = vld [vmem:[%s1 + $0x34] sm:$0xf]
  %v43 = vld [vmem:[%s1 + $0x38] sm:$0xf]
  %v44 = vld [vmem:[%s1 + $0x3c] sm:$0xf]
  %v45 = vld [vmem:[%s1 + $0x40] sm:$0xf]
  %v46 = vld [vmem:[%s1 + $0x44] sm:$0xf]
  %v47 = vld [vmem:[%s1 + $0x48] sm:$0xf]
  %v48 = vld [vmem:[%s1 + $0x4c] sm:$0xf]
  %v49 = vld [vmem:[%s1 + $0x50] sm:$0xf]
  %v50 = vld [vmem:[%s1 + $0x54] sm:$0xf]
  %v51 = vld [vmem:[%s1 + $0x58] sm:$0xf]
  %v52 = vld [vmem:[%s1 + $0x5c] sm:$0xf]
  %v53 = vld [vmem:[%s1 + $0x60] sm:$0xf]
  %v54 = vld [vmem:[%s1 + $0x64] sm:$0xf]
  %v55 = vld [vmem:[%s1 + $0x68] sm:$0xf]
  %v56 = vld [vmem:[%s1 + $0x6c] sm:$0xf]
  %v57 = vld [vmem:[%s1 + $0x70] sm:$0xf]
  %v58 = vld [vmem:[%s1 + $0x74] sm:$0xf]
  %v59 = vld [vmem:[%s1 + $0x78] sm:$0xf]
  %v60 = vld [vmem:[%s1 + $0x7c] sm:$0xf]
  %v61 = vld [vmem:[%s1 + $0x80] sm:$0xf]
  %v62 = vld [vmem:[%s1 + $0x84] sm:$0xf]
  %v63 = vld [vmem:[%s1 + $0x88] sm:$0xf]
  %v64 = vld [vmem:[%s1 + $0x8c] sm:$0xf]
  %v65 = vld [vmem:[%s1 + $0x90] sm:$0xf]
  %v66 = vld [vmem:[%s1 + $0x94] sm:$0xf]
  %v67 = vld [vmem:[%s1 + $0x98] sm:$0xf]
  %v68 = vld [vmem:[%s1 + $0x9c] sm:$0xf]
  %v69 = vld [vmem:[%s1 + $0xa0] sm:$0xf]
  %v70 = vld [vmem:[%s1 + $0xa4] sm:$0xf]
  %v71 = vld [vmem:[%s1 + $0xa8] sm:$0xf]
  %v72 = vld [vmem:[%s1 + $0xac] sm:$0xf]
  %v73 = vld [vmem:[%s1 + $0xb0] sm:$0xf]
  %v74 = vld [vmem:[%s1 + $0xb4] sm:$0xf]
  %v75 = vld [vmem:[%s1 + $0xb8] sm:$0xf]
  %v76 = vld [vmem:[%s1 + $0xbc] sm:$0xf]
  %v77 = vld [vmem:[%s1 + $0xc0] sm:$0xf]
  %v78 = vld [vmem:[%s1 + $0xc4] sm:$0xf]
  %v79 = vld [vmem:[%s2] sm:$0x1]
  %v81 = vlaneseq
  %v82 = vshrl.u32 %v81, 7
  %v83 = vsub.s32 0, %v82
  %v84 = vrot.slane %v79, %v83
  %v88 = vunpack.c.l.b16 %v27
  %v89 = vunpack.c.h.b16 %v27
  %v90 = vunpack.c.l.b16 %v28
  %v91 = vunpack.c.h.b16 %v28
  %v92 = vpack.c.b16 %v88, %v88
  %v93 = vpack.c.b16 %v89, %v89
  %v94 = vpack.c.b16 %v90, %v90
  %v95 = vpack.c.b16 %v91, %v91
  %v149 = vunpack.c.l.b16 %v29
  %v150 = vunpack.c.l.b16 %v30
  %v151 = vunpack.c.l.b16 %v31
  %v152 = vunpack.c.l.b16 %v32
  %v153 = vunpack.c.l.b16 %v33
  %v154 = vunpack.c.l.b16 %v34
  %v155 = vunpack.c.l.b16 %v35
  %v156 = vunpack.c.l.b16 %v36
  %v157 = vunpack.c.l.b16 %v37
  %v158 = vunpack.c.l.b16 %v38
  %v159 = vunpack.c.l.b16 %v39
  %v160 = vunpack.c.l.b16 %v40
  %v161 = vunpack.c.l.b16 %v41
  %v162 = vunpack.c.l.b16 %v42
  %v163 = vunpack.c.l.b16 %v43
  %v164 = vunpack.c.l.b16 %v44
  %v165 = vunpack.c.l.b16 %v45
  %v166 = vunpack.c.l.b16 %v46
  %v167 = vunpack.c.l.b16 %v47
  %v168 = vunpack.c.l.b16 %v48
  %v169 = vunpack.c.l.b16 %v49
  %v170 = vunpack.c.l.b16 %v50
  %v171 = vunpack.c.l.b16 %v51
  %v172 = vunpack.c.l.b16 %v52
  %v173 = vunpack.c.l.b16 %v53
  %v174 = vunpack.c.l.b16 %v54
  %v175 = vunpack.c.l.b16 %v55
  %v176 = vunpack.c.l.b16 %v56
  %v177 = vunpack.c.l.b16 %v57
  %v178 = vunpack.c.l.b16 %v58
  %v179 = vunpack.c.l.b16 %v59
  %v180 = vunpack.c.l.b16 %v60
  %v181 = vunpack.c.l.b16 %v61
  %v182 = vunpack.c.l.b16 %v62
  %v183 = vunpack.c.l.b16 %v63
  %v184 = vunpack.c.l.b16 %v64
  %v185 = vunpack.c.l.b16 %v65
  %v186 = vunpack.c.l.b16 %v66
  %v187 = vunpack.c.l.b16 %v67
  %v188 = vunpack.c.l.b16 %v68
  %v189 = vunpack.c.l.b16 %v69
  %v190 = vunpack.c.l.b16 %v70
  %v191 = vunpack.c.l.b16 %v71
  %v192 = vunpack.c.l.b16 %v72
  %v193 = vunpack.c.l.b16 %v73
  %v194 = vunpack.c.l.b16 %v74
  %v195 = vunpack.c.l.b16 %v75
  %v196 = vunpack.c.l.b16 %v76
  %v197 = vunpack.c.l.b16 %v77
  %v198 = vunpack.c.l.b16 %v78
  %v199 = vpack.c.b16 %v150, %v149
  %v200 = vpack.c.b16 %v152, %v151
  %v201 = vpack.c.b16 %v154, %v153
  %v202 = vpack.c.b16 %v156, %v155
  %v203 = vpack.c.b16 %v158, %v157
  %v204 = vpack.c.b16 %v160, %v159
  %v205 = vpack.c.b16 %v162, %v161
  %v206 = vpack.c.b16 %v164, %v163
  %v207 = vpack.c.b16 %v166, %v165
  %v208 = vpack.c.b16 %v168, %v167
  %v209 = vpack.c.b16 %v170, %v169
  %v210 = vpack.c.b16 %v172, %v171
  %v211 = vpack.c.b16 %v174, %v173
  %v212 = vpack.c.b16 %v176, %v175
  %v213 = vpack.c.b16 %v178, %v177
  %v214 = vpack.c.b16 %v180, %v179
  %v215 = vpack.c.b16 %v182, %v181
  %v216 = vpack.c.b16 %v184, %v183
  %v217 = vpack.c.b16 %v186, %v185
  %v218 = vpack.c.b16 %v188, %v187
  %v219 = vpack.c.b16 %v190, %v189
  %v220 = vpack.c.b16 %v192, %v191
  %v221 = vpack.c.b16 %v194, %v193
  %v222 = vpack.c.b16 %v196, %v195
  %v223 = vpack.c.b16 %v198, %v197
  %vm249 = vcmask 130048
  %v251 = vsel %vm249, %v95, 0
  %253 = vmatprep.subr.bf16.mxu0 0
  %254 = vmatpush1.bf16.msra.mxu0 %v199
  %255 = vmatprep.subr.bf16.mxu0 0
  %256 = vmatpush1.bf16.msra.mxu0 %v200
  %257 = vmatprep.subr.bf16.mxu0 0
  %258 = vmatpush1.bf16.msra.mxu0 %v201
  %259 = vmatprep.subr.bf16.mxu0 0
  %260 = vmatpush1.bf16.msra.mxu0 %v202
  %261 = vmatprep.subr.bf16.mxu0 0
  %262 = vmatpush1.bf16.msra.mxu0 %v203
  %263 = vmatprep.subr.bf16.mxu0 0
  %264 = vmatpush1.bf16.msra.mxu0 %v204
  %265 = vmatprep.subr.bf16.mxu0 0
  %266 = vmatpush1.bf16.msra.mxu0 %v205
  %267 = vmatprep.subr.bf16.mxu0 0
  %268 = vmatpush1.bf16.msra.mxu0 %v206
  %269 = vmatprep.subr.bf16.mxu0 0
  %270 = vmatpush1.bf16.msra.mxu0 %v207
  %271 = vmatprep.subr.bf16.mxu0 0
  %272 = vmatpush1.bf16.msra.mxu0 %v208
  %273 = vmatprep.subr.bf16.mxu0 0
  %274 = vmatpush1.bf16.msra.mxu0 %v209
  %275 = vmatprep.subr.bf16.mxu0 0
  %276 = vmatpush1.bf16.msra.mxu0 %v210
  %277 = vmatprep.subr.bf16.mxu0 0
  %278 = vmatpush1.bf16.msra.mxu0 %v211
  %279 = vmatprep.subr.bf16.mxu0 0
  %280 = vmatpush1.bf16.msra.mxu0 %v212
  %281 = vmatprep.subr.bf16.mxu0 0
  %282 = vmatpush1.bf16.msra.mxu0 %v213
  %283 = vmatprep.subr.bf16.mxu0 0
  %284 = vmatpush1.bf16.msra.mxu0 %v214
  %285 = vmatprep.mubr.bf16.mxu0 %v93
  %286 = vmatmul.mubr.bf16.gmra.mrb[0].mxu0 %v92
  %v287 = vpop.f32.mrb[0].mxu0
  %v288 = vadd.f32 %v84, %v287
  %v289 = vpop.f32.mrb[0].mxu0
  %v290 = vpop.f32.mrb[0].mxu0
  %v291 = vpop.f32.mrb[0].mxu0
  %292 = vdwg.mxu0
  %293 = vmatprep.subr.bf16.mxu0 0
  %294 = vmatpush1.bf16.msra.mxu0 %v215
  %295 = vmatprep.subr.bf16.mxu0 0
  %296 = vmatpush1.bf16.msra.mxu0 %v216
  %297 = vmatprep.subr.bf16.mxu0 0
  %298 = vmatpush1.bf16.msra.mxu0 %v217
  %299 = vmatprep.subr.bf16.mxu0 0
  %300 = vmatpush1.bf16.msra.mxu0 %v218
  %301 = vmatprep.subr.bf16.mxu0 0
  %302 = vmatpush1.bf16.msra.mxu0 %v219
  %303 = vmatprep.subr.bf16.mxu0 0
  %304 = vmatpush1.bf16.msra.mxu0 %v220
  %305 = vmatprep.subr.bf16.mxu0 0
  %306 = vmatpush1.bf16.msra.mxu0 %v221
  %307 = vmatprep.subr.bf16.mxu0 0
  %308 = vmatpush1.bf16.msra.mxu0 %v222
  %309 = vmatprep.subr.bf16.mxu0 0
  %310 = vmatpush1.bf16.msra.mxu0 %v223
  %311 = vmatprep.subr.bf16.mxu0 0
  %312 = vmatpush1.bf16.msra.mxu0 0
  %313 = vmatprep.subr.bf16.mxu0 0
  %314 = vmatpush1.bf16.msra.mxu0 0
  %315 = vmatprep.subr.bf16.mxu0 0
  %316 = vmatpush1.bf16.msra.mxu0 0
  %317 = vmatprep.subr.bf16.mxu0 0
  %318 = vmatpush1.bf16.msra.mxu0 0
  %319 = vmatprep.subr.bf16.mxu0 0
  %320 = vmatpush1.bf16.msra.mxu0 0
  %321 = vmatprep.subr.bf16.mxu0 0
  %322 = vmatpush1.bf16.msra.mxu0 0
  %323 = vmatprep.subr.bf16.mxu0 0
  %324 = vmatpush1.bf16.msra.mxu0 0
  %325 = vmatprep.mubr.bf16.mxu0 %v251
  %326 = vmatmul.mubr.bf16.gmra.mrb[0].mxu0 %v94
  %v327 = vpop.f32.mrb[0].mxu0
  %v328 = vadd.f32 %v288, %v327
  %v329 = vpop.f32.mrb[0].mxu0
  %v330 = vpop.f32.mrb[0].mxu0
  %v331 = vpop.f32.mrb[0].mxu0
  %332 = vdwg.mxu0
  %v333 = vmax.f32 %v328, 0.0
  %v334 = vpack.c.bf16 %v333, %v333
  %v335 = vld [vmem:[%s3] sm:$0xf]
  %v336 = vld [vmem:[%s3 + $0x4] sm:$0xf]
  %v337 = vld [vmem:[%s3 + $0x8] sm:$0xf]
  %v338 = vld [vmem:[%s3 + $0xc] sm:$0xf]
  %v339 = vld [vmem:[%s3 + $0x10] sm:$0xf]
  %v340 = vld [vmem:[%s3 + $0x14] sm:$0xf]
  %v341 = vld [vmem:[%s3 + $0x18] sm:$0xf]
  %v342 = vld [vmem:[%s3 + $0x1c] sm:$0xf]
  %v343 = vld [vmem:[%s3 + $0x20] sm:$0xf]
  %v344 = vld [vmem:[%s3 + $0x24] sm:$0xf]
  %v345 = vld [vmem:[%s3 + $0x28] sm:$0xf]
  %v346 = vld [vmem:[%s3 + $0x2c] sm:$0xf]
  %v347 = vld [vmem:[%s3 + $0x30] sm:$0xf]
  %v348 = vld [vmem:[%s3 + $0x34] sm:$0xf]
  %v349 = vld [vmem:[%s3 + $0x38] sm:$0xf]
  %v350 = vld [vmem:[%s4] sm:$0x1]
  %v352 = vlaneseq
  %v353 = vshrl.u32 %v352, 7
  %v354 = vsub.s32 0, %v353
  %v355 = vrot.slane %v350, %v354
  %v372 = vunpack.c.l.b16 %v335
  %v373 = vunpack.c.l.b16 %v336
  %v374 = vunpack.c.l.b16 %v337
  %v375 = vunpack.c.l.b16 %v338
  %v376 = vunpack.c.l.b16 %v339
  %v377 = vunpack.c.l.b16 %v340
  %v378 = vunpack.c.l.b16 %v341
  %v379 = vunpack.c.l.b16 %v342
  %v380 = vunpack.c.l.b16 %v343
  %v381 = vunpack.c.l.b16 %v344
  %v382 = vunpack.c.l.b16 %v345
  %v383 = vunpack.c.l.b16 %v346
  %v384 = vunpack.c.l.b16 %v347
  %v385 = vunpack.c.l.b16 %v348
  %v386 = vunpack.c.l.b16 %v349
  %v387 = vpack.c.b16 %v373, %v372
  %v388 = vpack.c.b16 %v375, %v374
  %v389 = vpack.c.b16 %v377, %v376
  %v390 = vpack.c.b16 %v379, %v378
  %v391 = vpack.c.b16 %v381, %v380
  %v392 = vpack.c.b16 %v383, %v382
  %v393 = vpack.c.b16 %v385, %v384
  %v394 = vpack.c.b16 %v386, %v386
  %vm402 = vcmask 982016
  %v404 = vsel %vm402, %v334, 0
  %vm406 = vcmask 1043456
  %v408 = vsel %vm406, %v394, 0
  %410 = vmatprep.subr.bf16.mxu0 0
  %411 = vmatpush1.bf16.msra.mxu0 %v387
  %412 = vmatprep.subr.bf16.mxu0 0
  %413 = vmatpush1.bf16.msra.mxu0 %v388
  %414 = vmatprep.subr.bf16.mxu0 0
  %415 = vmatpush1.bf16.msra.mxu0 %v389
  %416 = vmatprep.subr.bf16.mxu0 0
  %417 = vmatpush1.bf16.msra.mxu0 %v390
  %418 = vmatprep.subr.bf16.mxu0 0
  %419 = vmatpush1.bf16.msra.mxu0 %v391
  %420 = vmatprep.subr.bf16.mxu0 0
  %421 = vmatpush1.bf16.msra.mxu0 %v392
  %422 = vmatprep.subr.bf16.mxu0 0
  %423 = vmatpush1.bf16.msra.mxu0 %v393
  %424 = vmatprep.subr.bf16.mxu0 0
  %425 = vmatpush1.bf16.msra.mxu0 %v408
  %426 = vmatprep.subr.bf16.mxu0 0
  %427 = vmatpush1.bf16.msra.mxu0 0
  %428 = vmatprep.subr.bf16.mxu0 0
  %429 = vmatpush1.bf16.msra.mxu0 0
  %430 = vmatprep.subr.bf16.mxu0 0
  %431 = vmatpush1.bf16.msra.mxu0 0
  %432 = vmatprep.subr.bf16.mxu0 0
  %433 = vmatpush1.bf16.msra.mxu0 0
  %434 = vmatprep.subr.bf16.mxu0 0
  %435 = vmatpush1.bf16.msra.mxu0 0
  %436 = vmatprep.subr.bf16.mxu0 0
  %437 = vmatpush1.bf16.msra.mxu0 0
  %438 = vmatprep.subr.bf16.mxu0 0
  %439 = vmatpush1.bf16.msra.mxu0 0
  %440 = vmatprep.subr.bf16.mxu0 0
  %441 = vmatpush1.bf16.msra.mxu0 0
  %442 = vmatprep.mubr.bf16.mxu0 0
  %443 = vmatmul.mubr.bf16.gmra.mrb[0].mxu0 %v404
  %v444 = vpop.f32.mrb[0].mxu0
  %v445 = vadd.f32 %v355, %v444
  %v446 = vpop.f32.mrb[0].mxu0
  %v447 = vpop.f32.mrb[0].mxu0
  %v448 = vpop.f32.mrb[0].mxu0
  %449 = vdwg.mxu0
  %v450 = vmax.f32 %v445, 0.0
  %v451 = vpack.c.bf16 %v450, %v450
  %v452 = vld [vmem:[%s5] sm:$0xf]
  %v453 = vld [vmem:[%s5 + $0x4] sm:$0xf]
  %v454 = vld [vmem:[%s5 + $0x8] sm:$0xf]
  %v455 = vld [vmem:[%s5 + $0xc] sm:$0xf]
  %v456 = vld [vmem:[%s5 + $0x10] sm:$0xf]
  %v457 = vld [vmem:[%s5 + $0x14] sm:$0xf]
  %v458 = vld [vmem:[%s5 + $0x18] sm:$0xf]
  %v459 = vld [vmem:[%s5 + $0x1c] sm:$0xf]
  %v460 = vld [vmem:[%s5 + $0x20] sm:$0xf]
  %v461 = vld [vmem:[%s5 + $0x24] sm:$0xf]
  %v462 = vld [vmem:[%s5 + $0x28] sm:$0x3]
  %v463 = vld [vmem:[%s6] sm:$0x1]
  %v465 = vlaneseq
  %v466 = vshrl.u32 %v465, 7
  %v467 = vsub.s32 0, %v466
  %v468 = vrot.slane %v463, %v467
  %v481 = vunpack.c.l.b16 %v452
  %v482 = vunpack.c.l.b16 %v453
  %v483 = vunpack.c.l.b16 %v454
  %v484 = vunpack.c.l.b16 %v455
  %v485 = vunpack.c.l.b16 %v456
  %v486 = vunpack.c.l.b16 %v457
  %v487 = vunpack.c.l.b16 %v458
  %v488 = vunpack.c.l.b16 %v459
  %v489 = vunpack.c.l.b16 %v460
  %v490 = vunpack.c.l.b16 %v461
  %v491 = vunpack.c.l.b16 %v462
  %v492 = vpack.c.b16 %v482, %v481
  %v493 = vpack.c.b16 %v484, %v483
  %v494 = vpack.c.b16 %v486, %v485
  %v495 = vpack.c.b16 %v488, %v487
  %v496 = vpack.c.b16 %v490, %v489
  %v497 = vpack.c.b16 %v491, %v491
  %vm503 = vcmask 687104
  %v505 = vsel %vm503, %v451, 0
  %vm507 = vcmask 1041408
  %v509 = vsel %vm507, %v497, 0
  %511 = vmatprep.subr.bf16.mxu0 0
  %512 = vmatpush1.bf16.msra.mxu0 %v492
  %513 = vmatprep.subr.bf16.mxu0 0
  %514 = vmatpush1.bf16.msra.mxu0 %v493
  %515 = vmatprep.subr.bf16.mxu0 0
  %516 = vmatpush1.bf16.msra.mxu0 %v494
  %517 = vmatprep.subr.bf16.mxu0 0
  %518 = vmatpush1.bf16.msra.mxu0 %v495
  %519 = vmatprep.subr.bf16.mxu0 0
  %520 = vmatpush1.bf16.msra.mxu0 %v496
  %521 = vmatprep.subr.bf16.mxu0 0
  %522 = vmatpush1.bf16.msra.mxu0 %v509
  %523 = vmatprep.subr.bf16.mxu0 0
  %524 = vmatpush1.bf16.msra.mxu0 0
  %525 = vmatprep.subr.bf16.mxu0 0
  %526 = vmatpush1.bf16.msra.mxu0 0
  %527 = vmatprep.subr.bf16.mxu0 0
  %528 = vmatpush1.bf16.msra.mxu0 0
  %529 = vmatprep.subr.bf16.mxu0 0
  %530 = vmatpush1.bf16.msra.mxu0 0
  %531 = vmatprep.subr.bf16.mxu0 0
  %532 = vmatpush1.bf16.msra.mxu0 0
  %533 = vmatprep.subr.bf16.mxu0 0
  %534 = vmatpush1.bf16.msra.mxu0 0
  %535 = vmatprep.subr.bf16.mxu0 0
  %536 = vmatpush1.bf16.msra.mxu0 0
  %537 = vmatprep.subr.bf16.mxu0 0
  %538 = vmatpush1.bf16.msra.mxu0 0
  %539 = vmatprep.subr.bf16.mxu0 0
  %540 = vmatpush1.bf16.msra.mxu0 0
  %541 = vmatprep.subr.bf16.mxu0 0
  %542 = vmatpush1.bf16.msra.mxu0 0
  %543 = vmatprep.mubr.bf16.mxu0 0
  %544 = vmatmul.mubr.bf16.gmra.mrb[0].mxu0 %v505
  %v545 = vpop.f32.mrb[0].mxu0
  %v546 = vadd.f32 %v468, %v545
  %v547 = vpop.f32.mrb[0].mxu0
  %v548 = vpop.f32.mrb[0].mxu0
  %v549 = vpop.f32.mrb[0].mxu0
  %550 = vdwg.mxu0
  %vm551 = vcmask 80896
  %552 = vst.msk [vmem:[%s7] sm:$0xff] %vm551, %v546
  // Predicated region
  $region30: #{lenet_forward_pallas.5} parent=0 // pred_check
    _
  $region31: #{lenet_forward_pallas.5} parent=0 // pred_check_branch
    %554 = sbr.rel (0) target = $region33
  $region32: #{lenet_forward_pallas.5} parent=0 // pred_region
    _
  $region33: #{lenet_forward_pallas.5} parent=0 // pred_fallthru
    _
  // Predicated region
  $region34: #{lenet_forward_pallas.5} parent=0 // pred_check
    _
  $region35: #{lenet_forward_pallas.5} parent=0 // pred_check_branch
    %556 = sbr.rel (0) target = $region37
  $region36: #{lenet_forward_pallas.5} parent=0 // pred_region
    _
  $region37: #{lenet_forward_pallas.5} parent=0 // pred_fallthru
    _

</llo_original>
